<compile_context>
chip_gen: v5e
topology: v5e:2x2
jax: 0.10.0
libtpu: 0.0.40
codegen_flags: <defaults>
</compile_context>

<pallas_src>
import functools
import math

import jax
import jax.numpy as jnp
from jax.experimental import pallas as pl
from jax.experimental.pallas import tpu as pltpu

NUM_BOND_DIRECTION = 3
NUM_BOND_TYPE = 5
NUM_ATOM_TYPE = 119
NUM_CHIRALITY_TAG = 3

BN_EPS = 1e-5


def _round_up(x, m):
    return ((x + m - 1) // m) * m


# ------------------------------ fused kernel -------------------------------- #

def _ginet_layer_kernel(num_layer, n_real,
                        # inputs
                        h0_ref, a_ref, eb_ref,
                        w1_ref, b1_ref, w2_ref, b2_ref, gamma_ref, beta_ref,
                        p_ref, wf_ref, bf_ref, wo1_ref, bo1_ref, wo2_ref, bo2_ref,
                        # outputs
                        hg_ref, out_ref,
                        # scratch
                        h_ref):
    """One GINE layer per grid step; pooled heads emitted on the last step."""
    layer = pl.program_id(0)
    np_pad = h_ref.shape[0]

    # layer 0: load node embeddings into the resident h scratch
    @pl.when(layer == 0)
    def _():
        h_ref[...] = h0_ref[...]

    # row mask so BatchNorm statistics only cover the n_real real nodes
    row_mask = (jax.lax.broadcasted_iota(jnp.int32, (np_pad, 1), 0)
                < n_real).astype(jnp.float32)
    inv_n = 1.0 / float(n_real)

    # GINEConv aggregation:  aggr = A @ h + segment_sum(edge_emb, dst)
    # (bf16 x bf16 MXU matmul, f32 accumulate)
    aggr = jnp.dot(a_ref[...], h_ref[...].astype(jnp.bfloat16),
                   preferred_element_type=jnp.float32) + eb_ref[0]

    # update(): Linear -> ReLU -> Linear
    z = jnp.dot(aggr, w1_ref[0], preferred_element_type=jnp.float32) + b1_ref[0]
    z = jnp.maximum(z, 0.0)
    z = jnp.dot(z, w2_ref[0], preferred_element_type=jnp.float32) + b2_ref[0]

    # BatchNorm1d (training-mode batch statistics, biased variance),
    # fused single-pass statistics, masked to real rows.
    zm = z * row_mask
    s1 = jnp.sum(zm, axis=0, keepdims=True)
    s2 = jnp.sum(zm * zm, axis=0, keepdims=True)
    mean = s1 * inv_n
    var = s2 * inv_n - mean * mean
    zn = (z - mean) * jax.lax.rsqrt(var + BN_EPS) * gamma_ref[0] + beta_ref[0]

    # ReLU on all but the last layer; F.dropout(p=0) -> identity
    zn = jnp.where(layer < num_layer - 1, jnp.maximum(zn, 0.0), zn)

    # keep padded rows exactly zero (A's / P's columns for padded nodes are
    # zero anyway; this makes the invariant explicit)
    h_new = zn * row_mask
    h_ref[...] = h_new

    # pooled heads: mean-pool (as matmul) -> feat_lin -> out_lin
    @pl.when(layer == num_layer - 1)
    def _():
        pooled = jnp.dot(p_ref[...], h_new, preferred_element_type=jnp.float32)
        hg = jnp.dot(pooled, wf_ref[...],
                     preferred_element_type=jnp.float32) + bf_ref[...]
        hg_ref[...] = hg
        t = jnp.maximum(
            jnp.dot(hg, wo1_ref[...], preferred_element_type=jnp.float32)
            + bo1_ref[...], 0.0)
        out_ref[...] = jnp.dot(t, wo2_ref[...],
                               preferred_element_type=jnp.float32) + bo2_ref[...]


# ------------------------------ parameters --------------------------------- #

def _xavier_uniform(key, shape):
    fan_in, fan_out = shape
    limit = (6.0 / (fan_in + fan_out)) ** 0.5
    return jax.random.uniform(key, shape, jnp.float32, -limit, limit)


def init_params(key, num_layer, emb_dim, feat_dim):
    keys = iter(jax.random.split(key, 2 + 4 * num_layer + 3))

    def xu(shape):
        return _xavier_uniform(next(keys), shape)

    params = {
        "x_emb1": xu((NUM_ATOM_TYPE, emb_dim)),
        "x_emb2": xu((NUM_CHIRALITY_TAG, emb_dim)),
        "layers": [],
    }
    for _ in range(num_layer):
        params["layers"].append({
            "edge_emb1": xu((NUM_BOND_TYPE, emb_dim)),
            "edge_emb2": xu((NUM_BOND_DIRECTION, emb_dim)),
            "w1": xu((emb_dim, 2 * emb_dim)),
            "b1": jnp.zeros((1, 2 * emb_dim), jnp.float32),
            "w2": xu((2 * emb_dim, emb_dim)),
            "b2": jnp.zeros((1, emb_dim), jnp.float32),
            "gamma": jnp.ones((1, emb_dim), jnp.float32),   # BatchNorm1d defaults
            "beta": jnp.zeros((1, emb_dim), jnp.float32),
        })
    params["feat_w"] = xu((emb_dim, feat_dim))
    params["feat_b"] = jnp.zeros((1, feat_dim), jnp.float32)
    params["out_w1"] = xu((feat_dim, feat_dim))
    params["out_b1"] = jnp.zeros((1, feat_dim), jnp.float32)
    params["out_w2"] = xu((feat_dim, feat_dim // 2))
    params["out_b2"] = jnp.zeros((1, feat_dim // 2), jnp.float32)
    return params


# ------------------------------ forward pass -------------------------------- #

def _pad2(a, rows, cols):
    """Zero-pad a 2-D array up to (rows, cols)."""
    return jnp.zeros((rows, cols), a.dtype).at[:a.shape[0], :a.shape[1]].set(a)


def ginet_forward(params, x, edge_index, edge_attr, batch, motif_batch,
                  num_graphs, num_motifs, num_layer):
    N = x.shape[0]
    emb = params["x_emb1"].shape[1]
    hid = params["layers"][0]["w1"].shape[1]
    feat = params["feat_w"].shape[1]
    half = params["out_w2"].shape[1]

    # node embeddings (embedding gathers stay in XLA glue; all math in-kernel)
    h0 = params["x_emb1"][x[:, 0]] + params["x_emb2"][x[:, 1]]

    # add self loops; self-loop edge attr = (bond_type=4, direction=0)
    loops = jnp.arange(N, dtype=edge_index.dtype)
    ei = jnp.concatenate([edge_index, jnp.stack([loops, loops])], axis=1)
    self_loop_attr = jnp.concatenate(
        [jnp.full((N, 1), 4, edge_attr.dtype),
         jnp.zeros((N, 1), edge_attr.dtype)], axis=1)
    ea = jnp.concatenate([edge_attr, self_loop_attr], axis=0)
    src, dst = ei[0], ei[1]

    # padded (lane/sublane aligned) sizes
    Np = _round_up(N, 128)
    emb_p = _round_up(emb, 128)
    hid_p = _round_up(hid, 128)
    feat_p = _round_up(feat, 128)
    half_p = _round_up(half, 128)
    G_tot = num_graphs + num_motifs
    Gp = _round_up(G_tot, 8)

    # adjacency with self loops; entries are small integer edge counts -> the
    # bf16 cast is exact while halving HBM/VMEM bytes.
    # TODO(synk): for large N cache A across calls (or switch to a dst-sorted
    # edge-list + PrefetchScalarGridSpec kernel) instead of an N^2 scatter here.
    A = (jnp.zeros((Np, Np), jnp.float32)
         .at[dst, src].add(1.0)
         .astype(jnp.bfloat16))

    h0p = _pad2(h0, Np, emb_p)

    # per-layer edge bias: EB[l][i] = sum over edges e with dst(e)=i of
    # (edge_emb1_l[type(e)] + edge_emb2_l[dir(e)])
    EB = jnp.stack([
        _pad2(jnp.zeros((N, emb), jnp.float32).at[dst].add(
            lp["edge_emb1"][ea[:, 0]] + lp["edge_emb2"][ea[:, 1]]), Np, emb_p)
        for lp in params["layers"]])
    W1 = jnp.stack([_pad2(lp["w1"], emb_p, hid_p) for lp in params["layers"]])
    B1 = jnp.stack([_pad2(lp["b1"], 1, hid_p) for lp in params["layers"]])
    W2 = jnp.stack([_pad2(lp["w2"], hid_p, emb_p) for lp in params["layers"]])
    B2 = jnp.stack([_pad2(lp["b2"], 1, emb_p) for lp in params["layers"]])
    GAMMA = jnp.stack([_pad2(lp["gamma"], 1, emb_p) for lp in params["layers"]])
    BETA = jnp.stack([_pad2(lp["beta"], 1, emb_p) for lp in params["layers"]])

    # combined mean-pool matrix: graph pool rows then motif pool rows.
    # (PyTorch code drops motif-pool row 0 BEFORE feat_lin, so only motif ids
    #  1..num_motifs get pooling rows.)
    one_g = (batch[None, :] == jnp.arange(num_graphs)[:, None]).astype(jnp.float32)
    P_g = one_g / jnp.maximum(one_g.sum(axis=1, keepdims=True), 1.0)
    one_m = (motif_batch[None, :]
             == jnp.arange(1, num_motifs + 1)[:, None]).astype(jnp.float32)
    P_m = one_m / jnp.maximum(one_m.sum(axis=1, keepdims=True), 1.0)
    P = jnp.zeros((Gp, Np), jnp.float32)
    P = P.at[:num_graphs, :N].set(P_g)
    P = P.at[num_graphs:G_tot, :N].set(P_m)

    # padded head weights
    WF = _pad2(params["feat_w"], emb_p, feat_p)
    BF = _pad2(params["feat_b"], 1, feat_p)
    WO1 = _pad2(params["out_w1"], feat_p, feat_p)
    BO1 = _pad2(params["out_b1"], 1, feat_p)
    WO2 = _pad2(params["out_w2"], feat_p, half_p)
    BO2 = _pad2(params["out_b2"], 1, half_p)

    # BlockSpecs: per-layer arrays stream along the layer grid axis; the rest
    # use a constant block index (DMA'd once, resident across all grid steps).
    def layer_spec(r, c):
        return pl.BlockSpec((1, r, c), lambda l: (l, 0, 0))

    def const_spec(r, c):
        return pl.BlockSpec((r, c), lambda l: (0, 0))

    in_specs = [
        const_spec(Np, emb_p),        # h0
        const_spec(Np, Np),           # A (bf16)
        layer_spec(Np, emb_p),        # EB
        layer_spec(emb_p, hid_p),     # W1
        layer_spec(1, hid_p),         # B1
        layer_spec(hid_p, emb_p),     # W2
        layer_spec(1, emb_p),         # B2
        layer_spec(1, emb_p),         # GAMMA
        layer_spec(1, emb_p),         # BETA
        const_spec(Gp, Np),           # P
        const_spec(emb_p, feat_p),    # WF
        const_spec(1, feat_p),        # BF
        const_spec(feat_p, feat_p),   # WO1
        const_spec(1, feat_p),        # BO1
        const_spec(feat_p, half_p),   # WO2
        const_spec(1, half_p),        # BO2
    ]
    out_specs = (const_spec(Gp, feat_p), const_spec(Gp, half_p))

    # explicit VMEM budget (double-buffered streaming inputs counted twice)
    def nbytes(shape, itemsize=4):
        return math.prod(shape) * itemsize

    resident = (nbytes((Np, emb_p)) + nbytes((Np, Np), 2)
                + 2 * (nbytes((Np, emb_p)) + nbytes((emb_p, hid_p))
                       + nbytes((hid_p, emb_p)) + nbytes((1, hid_p))
                       + 3 * nbytes((1, emb_p)))
                + nbytes((Gp, Np)) + nbytes((emb_p, feat_p))
                + nbytes((feat_p, feat_p)) + nbytes((feat_p, half_p))
                + 2 * nbytes((1, feat_p)) + nbytes((1, half_p))
                + 2 * (nbytes((Gp, feat_p)) + nbytes((Gp, half_p)))
                + nbytes((Np, emb_p)))                       # h scratch
    vmem_limit = int(min(64 << 20, max(16 << 20, 2 * resident)))

    kernel = functools.partial(_ginet_layer_kernel, num_layer, N)

    hg_all, out_all = pl.pallas_call(
        kernel,
        grid=(num_layer,),
        in_specs=in_specs,
        out_specs=out_specs,
        out_shape=(jax.ShapeDtypeStruct((Gp, feat_p), jnp.float32),
                   jax.ShapeDtypeStruct((Gp, half_p), jnp.float32)),
        scratch_shapes=[pltpu.VMEM((Np, emb_p), jnp.float32)],   # resident h
        compiler_params=pltpu.CompilerParams(
            dimension_semantics=("arbitrary",),
            vmem_limit_bytes=vmem_limit),
    )(h0p, A, EB, W1, B1, W2, B2, GAMMA, BETA, P, WF, BF, WO1, BO1, WO2, BO2)

    h_global = hg_all[:num_graphs, :feat]
    out_global = out_all[:num_graphs, :half]
    out_sub = out_all[num_graphs:G_tot, :half]
    return h_global, out_global, out_sub


# --------------------------------- main ------------------------------------- #

if __name__ == "__main__":
    # small synthetic graph batch (2 graphs, 16 nodes, 20 directed edges)
    N, E = 16, 20
    emb_dim, feat_dim, num_layer = 32, 16, 5
    num_graphs = 2
    num_motifs = 3  # motif ids 1..3 (id 0 = "no motif", dropped by [1:])

    root = jax.random.PRNGKey(0)
    kp, k1, k2, k3, k4, k5 = jax.random.split(root, 6)

    params = init_params(kp, num_layer, emb_dim, feat_dim)

    x = jnp.stack([jax.random.randint(k1, (N,), 0, NUM_ATOM_TYPE),
                   jax.random.randint(k2, (N,), 0, NUM_CHIRALITY_TAG)],
                  axis=1).astype(jnp.int32)
    edge_index = jax.random.randint(k3, (2, E), 0, N).astype(jnp.int32)
    edge_attr = jnp.stack([jax.random.randint(k4, (E,), 0, 4),   # bond types 0..3
                           jax.random.randint(k5, (E,), 0, NUM_BOND_DIRECTION)],
                          axis=1).astype(jnp.int32)
    batch = jnp.concatenate([jnp.zeros(N // 2, jnp.int32),
                             jnp.ones(N - N // 2, jnp.int32)])
    motif_batch = jnp.concatenate([jnp.zeros(4, jnp.int32),
                                   jnp.full((4,), 1, jnp.int32),
                                   jnp.full((4,), 2, jnp.int32),
                                   jnp.full((4,), 3, jnp.int32)])

    forward = jax.jit(ginet_forward, static_argnums=(6, 7, 8))
    h_global, out_global, out_sub = forward(
        params, x, edge_index, edge_attr, batch, motif_batch,
        num_graphs, num_motifs, num_layer)
    jax.block_until_ready((h_global, out_global, out_sub))

    assert h_global.shape == (num_graphs, feat_dim)
    assert out_global.shape == (num_graphs, feat_dim // 2)
    assert out_sub.shape == (num_motifs, feat_dim // 2)
    assert all(bool(jnp.all(jnp.isfinite(t))) for t in (h_global, out_global, out_sub))
    print("KERNEL_OK")
</pallas_src>

<mosaic_0001>
module attributes {stable_mosaic.version = 11 : i64} {
  func.func @_ginet_layer_kernel(%arg0: i32, %arg1: memref<128x128xf32, #tpu.memory_space<vmem>>, %arg2: memref<128x128xbf16, #tpu.memory_space<vmem>>, %arg3: memref<1x128x128xf32, #tpu.memory_space<vmem>>, %arg4: memref<1x128x128xf32, #tpu.memory_space<vmem>>, %arg5: memref<1x1x128xf32, #tpu.memory_space<vmem>>, %arg6: memref<1x128x128xf32, #tpu.memory_space<vmem>>, %arg7: memref<1x1x128xf32, #tpu.memory_space<vmem>>, %arg8: memref<1x1x128xf32, #tpu.memory_space<vmem>>, %arg9: memref<1x1x128xf32, #tpu.memory_space<vmem>>, %arg10: memref<8x128xf32, #tpu.memory_space<vmem>>, %arg11: memref<128x128xf32, #tpu.memory_space<vmem>>, %arg12: memref<1x128xf32, #tpu.memory_space<vmem>>, %arg13: memref<128x128xf32, #tpu.memory_space<vmem>>, %arg14: memref<1x128xf32, #tpu.memory_space<vmem>>, %arg15: memref<128x128xf32, #tpu.memory_space<vmem>>, %arg16: memref<1x128xf32, #tpu.memory_space<vmem>>, %arg17: memref<8x128xf32, #tpu.memory_space<vmem>>, %arg18: memref<8x128xf32, #tpu.memory_space<vmem>>, %arg19: memref<128x128xf32, #tpu.memory_space<vmem>>) attributes {dimension_semantics = [#tpu.dimension_semantics<arbitrary>], iteration_bounds = array<i64: 5>, scalar_prefetch = 0 : i64, scratch_operands = 1 : i64, tpu.core_type = #tpu.core_type<tc>, window_params = [{pipeline_mode = #tpu.pipeline_mode<synchronous>, transform_indices = @transform_0, window_bounds = array<i64: 128, 128>}, {pipeline_mode = #tpu.pipeline_mode<synchronous>, transform_indices = @transform_1, window_bounds = array<i64: 128, 128>}, {transform_indices = @transform_2, window_bounds = array<i64: 1, 128, 128>}, {transform_indices = @transform_3, window_bounds = array<i64: 1, 128, 128>}, {transform_indices = @transform_4, window_bounds = array<i64: 1, 1, 128>}, {transform_indices = @transform_5, window_bounds = array<i64: 1, 128, 128>}, {transform_indices = @transform_6, window_bounds = array<i64: 1, 1, 128>}, {transform_indices = @transform_7, window_bounds = array<i64: 1, 1, 128>}, {transform_indices = @transform_8, window_bounds = array<i64: 1, 1, 128>}, {pipeline_mode = #tpu.pipeline_mode<synchronous>, transform_indices = @transform_9, window_bounds = array<i64: 8, 128>}, {pipeline_mode = #tpu.pipeline_mode<synchronous>, transform_indices = @transform_10, window_bounds = array<i64: 128, 128>}, {pipeline_mode = #tpu.pipeline_mode<synchronous>, transform_indices = @transform_11, window_bounds = array<i64: 1, 128>}, {pipeline_mode = #tpu.pipeline_mode<synchronous>, transform_indices = @transform_12, window_bounds = array<i64: 128, 128>}, {pipeline_mode = #tpu.pipeline_mode<synchronous>, transform_indices = @transform_13, window_bounds = array<i64: 1, 128>}, {pipeline_mode = #tpu.pipeline_mode<synchronous>, transform_indices = @transform_14, window_bounds = array<i64: 128, 128>}, {pipeline_mode = #tpu.pipeline_mode<synchronous>, transform_indices = @transform_15, window_bounds = array<i64: 1, 128>}, {pipeline_mode = #tpu.pipeline_mode<synchronous>, transform_indices = @transform_16, window_bounds = array<i64: 8, 128>}, {pipeline_mode = #tpu.pipeline_mode<synchronous>, transform_indices = @transform_17, window_bounds = array<i64: 8, 128>}]} {
    %c0_i32 = arith.constant 0 : i32
    %0 = arith.cmpi eq, %arg0, %c0_i32 : i32
    %1 = arith.extui %0 : i1 to i32
    %c0_i32_0 = arith.constant 0 : i32
    %2 = arith.cmpi ne, %1, %c0_i32_0 : i32
    scf.if %2 {
      %c0_38 = arith.constant 0 : index
      %c0_39 = arith.constant 0 : index
      %69 = vector.load %arg1[%c0_38, %c0_39] : memref<128x128xf32, #tpu.memory_space<vmem>>, vector<128x128xf32>
      %c0_40 = arith.constant 0 : index
      %c0_41 = arith.constant 0 : index
      %70 = vector.load %arg19[%c0_40, %c0_41] : memref<128x128xf32, #tpu.memory_space<vmem>>, vector<128x128xf32>
      tpu.vector_store %arg19[%c0_40, %c0_41], %69 {strides = array<i32>} : memref<128x128xf32, #tpu.memory_space<vmem>>, vector<128x128xf32>,
    } else {
    }
    %3 = tpu.iota {dimensions = array<i32: 0>} : vector<128x1xi32>
    %c16_i32 = arith.constant 16 : i32
    %4 = vector.broadcast %c16_i32 : i32 to vector<128x1xi32>
    %5 = arith.cmpi slt, %3, %4 : vector<128x1xi32>
    %6 = arith.extui %5 : vector<128x1xi1> to vector<128x1xi32>
    %7 = arith.sitofp %6 : vector<128x1xi32> to vector<128x1xf32>
    %c0 = arith.constant 0 : index
    %c0_1 = arith.constant 0 : index
    %8 = vector.load %arg2[%c0, %c0_1] : memref<128x128xbf16, #tpu.memory_space<vmem>>, vector<128x128xbf16>
    %c0_2 = arith.constant 0 : index
    %c0_3 = arith.constant 0 : index
    %9 = vector.load %arg19[%c0_2, %c0_3] : memref<128x128xf32, #tpu.memory_space<vmem>>, vector<128x128xf32>
    %10 = arith.truncf %9 : vector<128x128xf32> to vector<128x128xbf16>
    %cst = arith.constant dense<0.000000e+00> : vector<128x128xf32>
    %11 = tpu.matmul %8, %10, %cst {dimension_numbers = #tpu.dot_dimension_numbers<[1], [0], [0], [1], [0, 0, 1, 1], [], []>} : vector<128x128xbf16>, vector<128x128xbf16>, vector<128x128xf32> -> vector<128x128xf32>
    %c0_4 = arith.constant 0 : index
    %c0_5 = arith.constant 0 : index
    %c0_6 = arith.constant 0 : index
    %12 = vector.load %arg3[%c0_4, %c0_5, %c0_6] : memref<1x128x128xf32, #tpu.memory_space<vmem>>, vector<1x128x128xf32>
    %13 = vector.shape_cast %12 : vector<1x128x128xf32> to vector<128x128xf32>
    %14 = arith.addf %11, %13 : vector<128x128xf32>
    %c0_7 = arith.constant 0 : index
    %c0_8 = arith.constant 0 : index
    %c0_9 = arith.constant 0 : index
    %15 = vector.load %arg4[%c0_7, %c0_8, %c0_9] : memref<1x128x128xf32, #tpu.memory_space<vmem>>, vector<1x128x128xf32>
    %16 = vector.shape_cast %15 : vector<1x128x128xf32> to vector<128x128xf32>
    %cst_10 = arith.constant dense<0.000000e+00> : vector<128x128xf32>
    %17 = tpu.matmul %14, %16, %cst_10 {dimension_numbers = #tpu.dot_dimension_numbers<[1], [0], [0], [1], [0, 0, 1, 1], [], []>} : vector<128x128xf32>, vector<128x128xf32>, vector<128x128xf32> -> vector<128x128xf32>
    %c0_11 = arith.constant 0 : index
    %c0_12 = arith.constant 0 : index
    %c0_13 = arith.constant 0 : index
    %18 = vector.load %arg5[%c0_11, %c0_12, %c0_13] : memref<1x1x128xf32, #tpu.memory_space<vmem>>, vector<1x1x128xf32>
    %19 = vector.shape_cast %18 : vector<1x1x128xf32> to vector<1x128xf32>
    %20 = vector.broadcast %19 : vector<1x128xf32> to vector<128x128xf32>
    %21 = arith.addf %17, %20 : vector<128x128xf32>
    %cst_14 = arith.constant 0.000000e+00 : f32
    %22 = vector.broadcast %cst_14 : f32 to vector<128x128xf32>
    %23 = arith.maximumf %21, %22 : vector<128x128xf32>
    %c0_15 = arith.constant 0 : index
    %c0_16 = arith.constant 0 : index
    %c0_17 = arith.constant 0 : index
    %24 = vector.load %arg6[%c0_15, %c0_16, %c0_17] : memref<1x128x128xf32, #tpu.memory_space<vmem>>, vector<1x128x128xf32>
    %25 = vector.shape_cast %24 : vector<1x128x128xf32> to vector<128x128xf32>
    %cst_18 = arith.constant dense<0.000000e+00> : vector<128x128xf32>
    %26 = tpu.matmul %23, %25, %cst_18 {dimension_numbers = #tpu.dot_dimension_numbers<[1], [0], [0], [1], [0, 0, 1, 1], [], []>} : vector<128x128xf32>, vector<128x128xf32>, vector<128x128xf32> -> vector<128x128xf32>
    %c0_19 = arith.constant 0 : index
    %c0_20 = arith.constant 0 : index
    %c0_21 = arith.constant 0 : index
    %27 = vector.load %arg7[%c0_19, %c0_20, %c0_21] : memref<1x1x128xf32, #tpu.memory_space<vmem>>, vector<1x1x128xf32>
    %28 = vector.shape_cast %27 : vector<1x1x128xf32> to vector<1x128xf32>
    %29 = vector.broadcast %28 : vector<1x128xf32> to vector<128x128xf32>
    %30 = arith.addf %26, %29 : vector<128x128xf32>
    %31 = vector.broadcast %7 : vector<128x1xf32> to vector<128x128xf32>
    %32 = arith.mulf %30, %31 : vector<128x128xf32>
    %cst_22 = arith.constant dense<0.000000e+00> : vector<128xf32>
    %33 = vector.multi_reduction <add>, %32, %cst_22 [0] : vector<128x128xf32> to vector<128xf32>
    %34 = vector.shape_cast %33 : vector<128xf32> to vector<1x128xf32>
    %35 = arith.mulf %32, %32 : vector<128x128xf32>
    %cst_23 = arith.constant dense<0.000000e+00> : vector<128xf32>
    %36 = vector.multi_reduction <add>, %35, %cst_23 [0] : vector<128x128xf32> to vector<128xf32>
    %37 = vector.shape_cast %36 : vector<128xf32> to vector<1x128xf32>
    %cst_24 = arith.constant 6.250000e-02 : f32
    %38 = vector.broadcast %cst_24 : f32 to vector<1x128xf32>
    %39 = arith.mulf %34, %38 : vector<1x128xf32>
    %cst_25 = arith.constant 6.250000e-02 : f32
    %40 = vector.broadcast %cst_25 : f32 to vector<1x128xf32>
    %41 = arith.mulf %37, %40 : vector<1x128xf32>
    %42 = arith.mulf %39, %39 : vector<1x128xf32>
    %43 = arith.subf %41, %42 : vector<1x128xf32>
    %44 = vector.broadcast %39 : vector<1x128xf32> to vector<128x128xf32>
    %45 = arith.subf %30, %44 : vector<128x128xf32>
    %cst_26 = arith.constant 9.99999974E-6 : f32
    %46 = vector.broadcast %cst_26 : f32 to vector<1x128xf32>
    %47 = arith.addf %43, %46 : vector<1x128xf32>
    %48 = math.rsqrt %47 : vector<1x128xf32>
    %49 = vector.broadcast %48 : vector<1x128xf32> to vector<128x128xf32>
    %50 = arith.mulf %45, %49 : vector<128x128xf32>
    %c0_27 = arith.constant 0 : index
    %c0_28 = arith.constant 0 : index
    %c0_29 = arith.constant 0 : index
    %51 = vector.load %arg8[%c0_27, %c0_28, %c0_29] : memref<1x1x128xf32, #tpu.memory_space<vmem>>, vector<1x1x128xf32>
    %52 = vector.shape_cast %51 : vector<1x1x128xf32> to vector<1x128xf32>
    %53 = vector.broadcast %52 : vector<1x128xf32> to vector<128x128xf32>
    %54 = arith.mulf %50, %53 : vector<128x128xf32>
    %c0_30 = arith.constant 0 : index
    %c0_31 = arith.constant 0 : index
    %c0_32 = arith.constant 0 : index
    %55 = vector.load %arg9[%c0_30, %c0_31, %c0_32] : memref<1x1x128xf32, #tpu.memory_space<vmem>>, vector<1x1x128xf32>
    %56 = vector.shape_cast %55 : vector<1x1x128xf32> to vector<1x128xf32>
    %57 = vector.broadcast %56 : vector<1x128xf32> to vector<128x128xf32>
    %58 = arith.addf %54, %57 : vector<128x128xf32>
    %c4_i32 = arith.constant 4 : i32
    %59 = arith.cmpi slt, %arg0, %c4_i32 : i32
    %cst_33 = arith.constant 0.000000e+00 : f32
    %60 = vector.broadcast %cst_33 : f32 to vector<128x128xf32>
    %61 = arith.maximumf %58, %60 : vector<128x128xf32>
    %62 = arith.select %59, %61, %58 : vector<128x128xf32>
    %63 = vector.broadcast %7 : vector<128x1xf32> to vector<128x128xf32>
    %64 = arith.mulf %62, %63 : vector<128x128xf32>
    %c0_34 = arith.constant 0 : index
    %c0_35 = arith.constant 0 : index
    %65 = vector.load %arg19[%c0_34, %c0_35] : memref<128x128xf32, #tpu.memory_space<vmem>>, vector<128x128xf32>
    tpu.vector_store %arg19[%c0_34, %c0_35], %64 {strides = array<i32>} : memref<128x128xf32, #tpu.memory_space<vmem>>, vector<128x128xf32>,
    %c4_i32_36 = arith.constant 4 : i32
    %66 = arith.cmpi eq, %arg0, %c4_i32_36 : i32
    %67 = arith.extui %66 : i1 to i32
    %c0_i32_37 = arith.constant 0 : i32
    %68 = arith.cmpi ne, %67, %c0_i32_37 : i32
    scf.if %68 {
      %c0_38 = arith.constant 0 : index
      %c0_39 = arith.constant 0 : index
      %69 = vector.load %arg10[%c0_38, %c0_39] : memref<8x128xf32, #tpu.memory_space<vmem>>, vector<8x128xf32>
      %cst_40 = arith.constant dense<0.000000e+00> : vector<8x128xf32>
      %70 = tpu.matmul %69, %64, %cst_40 {dimension_numbers = #tpu.dot_dimension_numbers<[1], [0], [0], [1], [0, 0, 1, 1], [], []>} : vector<8x128xf32>, vector<128x128xf32>, vector<8x128xf32> -> vector<8x128xf32>
      %c0_41 = arith.constant 0 : index
      %c0_42 = arith.constant 0 : index
      %71 = vector.load %arg11[%c0_41, %c0_42] : memref<128x128xf32, #tpu.memory_space<vmem>>, vector<128x128xf32>
      %cst_43 = arith.constant dense<0.000000e+00> : vector<8x128xf32>
      %72 = tpu.matmul %70, %71, %cst_43 {dimension_numbers = #tpu.dot_dimension_numbers<[1], [0], [0], [1], [0, 0, 1, 1], [], []>} : vector<8x128xf32>, vector<128x128xf32>, vector<8x128xf32> -> vector<8x128xf32>
      %c0_44 = arith.constant 0 : index
      %c0_45 = arith.constant 0 : index
      %73 = vector.load %arg12[%c0_44, %c0_45] : memref<1x128xf32, #tpu.memory_space<vmem>>, vector<1x128xf32>
      %74 = vector.broadcast %73 : vector<1x128xf32> to vector<8x128xf32>
      %75 = arith.addf %72, %74 : vector<8x128xf32>
      %c0_46 = arith.constant 0 : index
      %c0_47 = arith.constant 0 : index
      %76 = vector.load %arg17[%c0_46, %c0_47] : memref<8x128xf32, #tpu.memory_space<vmem>>, vector<8x128xf32>
      tpu.vector_store %arg17[%c0_46, %c0_47], %75 {strides = array<i32>} : memref<8x128xf32, #tpu.memory_space<vmem>>, vector<8x128xf32>,
      %c0_48 = arith.constant 0 : index
      %c0_49 = arith.constant 0 : index
      %77 = vector.load %arg13[%c0_48, %c0_49] : memref<128x128xf32, #tpu.memory_space<vmem>>, vector<128x128xf32>
      %cst_50 = arith.constant dense<0.000000e+00> : vector<8x128xf32>
      %78 = tpu.matmul %75, %77, %cst_50 {dimension_numbers = #tpu.dot_dimension_numbers<[1], [0], [0], [1], [0, 0, 1, 1], [], []>} : vector<8x128xf32>, vector<128x128xf32>, vector<8x128xf32> -> vector<8x128xf32>
      %c0_51 = arith.constant 0 : index
      %c0_52 = arith.constant 0 : index
      %79 = vector.load %arg14[%c0_51, %c0_52] : memref<1x128xf32, #tpu.memory_space<vmem>>, vector<1x128xf32>
      %80 = vector.broadcast %79 : vector<1x128xf32> to vector<8x128xf32>
      %81 = arith.addf %78, %80 : vector<8x128xf32>
      %cst_53 = arith.constant 0.000000e+00 : f32
      %82 = vector.broadcast %cst_53 : f32 to vector<8x128xf32>
      %83 = arith.maximumf %81, %82 : vector<8x128xf32>
      %c0_54 = arith.constant 0 : index
      %c0_55 = arith.constant 0 : index
      %84 = vector.load %arg15[%c0_54, %c0_55] : memref<128x128xf32, #tpu.memory_space<vmem>>, vector<128x128xf32>
      %cst_56 = arith.constant dense<0.000000e+00> : vector<8x128xf32>
      %85 = tpu.matmul %83, %84, %cst_56 {dimension_numbers = #tpu.dot_dimension_numbers<[1], [0], [0], [1], [0, 0, 1, 1], [], []>} : vector<8x128xf32>, vector<128x128xf32>, vector<8x128xf32> -> vector<8x128xf32>
      %c0_57 = arith.constant 0 : index
      %c0_58 = arith.constant 0 : index
      %86 = vector.load %arg16[%c0_57, %c0_58] : memref<1x128xf32, #tpu.memory_space<vmem>>, vector<1x128xf32>
      %87 = vector.broadcast %86 : vector<1x128xf32> to vector<8x128xf32>
      %88 = arith.addf %85, %87 : vector<8x128xf32>
      %c0_59 = arith.constant 0 : index
      %c0_60 = arith.constant 0 : index
      %89 = vector.load %arg18[%c0_59, %c0_60] : memref<8x128xf32, #tpu.memory_space<vmem>>, vector<8x128xf32>
      tpu.vector_store %arg18[%c0_59, %c0_60], %88 {strides = array<i32>} : memref<8x128xf32, #tpu.memory_space<vmem>>, vector<8x128xf32>,
    } else {
    }
    return
  }
  func.func @transform_0(%arg0: i32) -> (i32, i32) {
    %c0_i32 = arith.constant 0 : i32
    %c0_i32_0 = arith.constant 0 : i32
    %c0_i32_1 = arith.constant 0 : i32
    return %c0_i32, %c0_i32_0 : i32, i32
  }
  func.func @transform_1(%arg0: i32) -> (i32, i32) {
    %c0_i32 = arith.constant 0 : i32
    %c0_i32_0 = arith.constant 0 : i32
    %c0_i32_1 = arith.constant 0 : i32
    return %c0_i32, %c0_i32_0 : i32, i32
  }
  func.func @transform_2(%arg0: i32) -> (i32, i32, i32) {
    %c0_i32 = arith.constant 0 : i32
    %c0_i32_0 = arith.constant 0 : i32
    %c0_i32_1 = arith.constant 0 : i32
    return %arg0, %c0_i32, %c0_i32_0 : i32, i32, i32
  }
  func.func @transform_3(%arg0: i32) -> (i32, i32, i32) {
    %c0_i32 = arith.constant 0 : i32
    %c0_i32_0 = arith.constant 0 : i32
    %c0_i32_1 = arith.constant 0 : i32
    return %arg0, %c0_i32, %c0_i32_0 : i32, i32, i32
  }
  func.func @transform_4(%arg0: i32) -> (i32, i32, i32) {
    %c0_i32 = arith.constant 0 : i32
    %c0_i32_0 = arith.constant 0 : i32
    %c0_i32_1 = arith.constant 0 : i32
    return %arg0, %c0_i32, %c0_i32_0 : i32, i32, i32
  }
  func.func @transform_5(%arg0: i32) -> (i32, i32, i32) {
    %c0_i32 = arith.constant 0 : i32
    %c0_i32_0 = arith.constant 0 : i32
    %c0_i32_1 = arith.constant 0 : i32
    return %arg0, %c0_i32, %c0_i32_0 : i32, i32, i32
  }
  func.func @transform_6(%arg0: i32) -> (i32, i32, i32) {
    %c0_i32 = arith.constant 0 : i32
    %c0_i32_0 = arith.constant 0 : i32
    %c0_i32_1 = arith.constant 0 : i32
    return %arg0, %c0_i32, %c0_i32_0 : i32, i32, i32
  }
  func.func @transform_7(%arg0: i32) -> (i32, i32, i32) {
    %c0_i32 = arith.constant 0 : i32
    %c0_i32_0 = arith.constant 0 : i32
    %c0_i32_1 = arith.constant 0 : i32
    return %arg0, %c0_i32, %c0_i32_0 : i32, i32, i32
  }
  func.func @transform_8(%arg0: i32) -> (i32, i32, i32) {
    %c0_i32 = arith.constant 0 : i32
    %c0_i32_0 = arith.constant 0 : i32
    %c0_i32_1 = arith.constant 0 : i32
    return %arg0, %c0_i32, %c0_i32_0 : i32, i32, i32
  }
  func.func @transform_9(%arg0: i32) -> (i32, i32) {
    %c0_i32 = arith.constant 0 : i32
    %c0_i32_0 = arith.constant 0 : i32
    %c0_i32_1 = arith.constant 0 : i32
    return %c0_i32, %c0_i32_0 : i32, i32
  }
  func.func @transform_10(%arg0: i32) -> (i32, i32) {
    %c0_i32 = arith.constant 0 : i32
    %c0_i32_0 = arith.constant 0 : i32
    %c0_i32_1 = arith.constant 0 : i32
    return %c0_i32, %c0_i32_0 : i32, i32
  }
  func.func @transform_11(%arg0: i32) -> (i32, i32) {
    %c0_i32 = arith.constant 0 : i32
    %c0_i32_0 = arith.constant 0 : i32
    %c0_i32_1 = arith.constant 0 : i32
    return %c0_i32, %c0_i32_0 : i32, i32
  }
  func.func @transform_12(%arg0: i32) -> (i32, i32) {
    %c0_i32 = arith.constant 0 : i32
    %c0_i32_0 = arith.constant 0 : i32
    %c0_i32_1 = arith.constant 0 : i32
    return %c0_i32, %c0_i32_0 : i32, i32
  }
  func.func @transform_13(%arg0: i32) -> (i32, i32) {
    %c0_i32 = arith.constant 0 : i32
    %c0_i32_0 = arith.constant 0 : i32
    %c0_i32_1 = arith.constant 0 : i32
    return %c0_i32, %c0_i32_0 : i32, i32
  }
  func.func @transform_14(%arg0: i32) -> (i32, i32) {
    %c0_i32 = arith.constant 0 : i32
    %c0_i32_0 = arith.constant 0 : i32
    %c0_i32_1 = arith.constant 0 : i32
    return %c0_i32, %c0_i32_0 : i32, i32
  }
  func.func @transform_15(%arg0: i32) -> (i32, i32) {
    %c0_i32 = arith.constant 0 : i32
    %c0_i32_0 = arith.constant 0 : i32
    %c0_i32_1 = arith.constant 0 : i32
    return %c0_i32, %c0_i32_0 : i32, i32
  }
  func.func @transform_16(%arg0: i32) -> (i32, i32) {
    %c0_i32 = arith.constant 0 : i32
    %c0_i32_0 = arith.constant 0 : i32
    %c0_i32_1 = arith.constant 0 : i32
    return %c0_i32, %c0_i32_0 : i32, i32
  }
  func.func @transform_17(%arg0: i32) -> (i32, i32) {
    %c0_i32 = arith.constant 0 : i32
    %c0_i32_0 = arith.constant 0 : i32
    %c0_i32_1 = arith.constant 0 : i32
    return %c0_i32, %c0_i32_0 : i32, i32
  }
}

</mosaic_0001>

<llo_original>
// kernel: ginet_forward.1
$region0: #{ginet_forward.1}
  #allocation0 [shape = 'u32[]', space=smem, size = 0x4, offset = 0x4, fixed_abs, tag = 'smem constant byte address 0x4 - core index']
  #allocation1 [shape = 'u32[72,128]{1,0:T(1,128)}', space=vmem, size = 0x9000, scoped, tag = 'internal scratch']
  #allocation2 [shape = 'f32[128,128]{1,0:T(8,128)}', space=vmem, size = 0x10000, scoped, tag = 'scratch operand']
  %s0 = inlined_call_operand.vmem [shape: f32[128,128], index: 0, kind: input, shape index: {}]
  %s1 = inlined_call_operand.vmem [shape: bf16[128,128], index: 1, kind: input, shape index: {}]
  %s2 = inlined_call_operand.vmem [shape: f32[5,128,128], index: 2, kind: input, shape index: {}]
  %s3 = inlined_call_operand.vmem [shape: f32[5,128,128], index: 3, kind: input, shape index: {}]
  %s4 = inlined_call_operand.vmem [shape: f32[5,1,128], index: 4, kind: input, shape index: {}]
  %s5 = inlined_call_operand.vmem [shape: f32[5,128,128], index: 5, kind: input, shape index: {}]
  %s6 = inlined_call_operand.vmem [shape: f32[5,1,128], index: 6, kind: input, shape index: {}]
  %s7 = inlined_call_operand.vmem [shape: f32[5,1,128], index: 7, kind: input, shape index: {}]
  %s8 = inlined_call_operand.vmem [shape: f32[5,1,128], index: 8, kind: input, shape index: {}]
  %s9 = inlined_call_operand.vmem [shape: f32[8,128], index: 9, kind: input, shape index: {}]
  %s10 = inlined_call_operand.vmem [shape: f32[128,128], index: 10, kind: input, shape index: {}]
  %s11 = inlined_call_operand.vmem [shape: f32[1,128], index: 11, kind: input, shape index: {}]
  %s12 = inlined_call_operand.vmem [shape: f32[128,128], index: 12, kind: input, shape index: {}]
  %s13 = inlined_call_operand.vmem [shape: f32[1,128], index: 13, kind: input, shape index: {}]
  %s14 = inlined_call_operand.vmem [shape: f32[128,128], index: 14, kind: input, shape index: {}]
  %s15 = inlined_call_operand.vmem [shape: f32[1,128], index: 15, kind: input, shape index: {}]
  %s16 = inlined_call_operand.vmem [shape: f32[8,128], index: 16, kind: output, shape index: {0}]
  %s17 = inlined_call_operand.vmem [shape: f32[8,128], index: 17, kind: output, shape index: {1}]
  %18 = xla_tuple %s16, %s17
  %s19 = sld [smem:[#allocation0]]
  $region113: #{ginet_forward.1} parent=0
    _
  %s21 = ssub.s32 1, %s19
  %s22 = scalar_select 0, %s21, %s19
  loop: start=0, step=1, limit=7
  $region2: #{ginet_forward.1} parent=0 // loop_pre_header
    _
  $region3: #{ginet_forward.1} parent=0 // loop_header
    %s24 = sphi 0, %s28
    %p25 = scmp.ge.s32.totalorder %s24, 7
    %s32 = sphi 0, %s32
    %s34 = sphi 0, %s32
    %s35 = sphi 0, %s34
    %s49 = sphi 0, %s35
    %s53 = sphi 0, %s53
    %s55 = sphi 0, %s53
    %s56 = sphi 0, %s55
    %s70 = sphi 0, %s56
    %s76 = sphi 0, %s78
    %s79 = sphi 0, %s76
    %s80 = sphi 0, %s79
    %s96 = sphi 0, %s80
    %s102 = sphi 0, %s104
    %s105 = sphi 0, %s102
    %s106 = sphi 0, %s105
    %s122 = sphi 0, %s106
    %s128 = sphi 0, %s130
    %s131 = sphi 0, %s128
    %s132 = sphi 0, %s131
    %s148 = sphi 0, %s132
    %s154 = sphi 0, %s156
    %s157 = sphi 0, %s154
    %s158 = sphi 0, %s157
    %s174 = sphi 0, %s158
    %s180 = sphi 0, %s182
    %s183 = sphi 0, %s180
    %s184 = sphi 0, %s183
    %s200 = sphi 0, %s184
    %s206 = sphi 0, %s208
    %s209 = sphi 0, %s206
    %s210 = sphi 0, %s209
    %s226 = sphi 0, %s210
    %s232 = sphi 0, %s234
    %s235 = sphi 0, %s232
    %s236 = sphi 0, %s235
    %s252 = sphi 0, %s236
    %s256 = sphi 0, %s256
    %s258 = sphi 0, %s256
    %s259 = sphi 0, %s258
    %s273 = sphi 0, %s259
    %s277 = sphi 0, %s277
    %s279 = sphi 0, %s277
    %s280 = sphi 0, %s279
    %s294 = sphi 0, %s280
    %s298 = sphi 0, %s298
    %s300 = sphi 0, %s298
    %s301 = sphi 0, %s300
    %s315 = sphi 0, %s301
    %s319 = sphi 0, %s319
    %s321 = sphi 0, %s319
    %s322 = sphi 0, %s321
    %s336 = sphi 0, %s322
    %s340 = sphi 0, %s340
    %s342 = sphi 0, %s340
    %s343 = sphi 0, %s342
    %s357 = sphi 0, %s343
    %s361 = sphi 0, %s361
    %s363 = sphi 0, %s361
    %s364 = sphi 0, %s363
    %s378 = sphi 0, %s364
    %s382 = sphi 0, %s382
    %s384 = sphi 0, %s382
    %s385 = sphi 0, %s384
    %s399 = sphi 0, %s385
    %s403 = sphi 0, %s403
    %s405 = sphi 0, %s403
    %s406 = sphi 0, %s405
    %s420 = sphi 0, %s406
    %s424 = sphi 0, %s424
    %s426 = sphi 0, %s424
    %s427 = sphi 0, %s426
    %s441 = sphi 0, %s427
  $region4: #{ginet_forward.1} parent=0 // loop_header_branch
    %27 = sbr.rel (%p25) target = $region8
  $region5: #{ginet_forward.1} parent=0 // loop_body
    %s29 = ssub.s32 %s24, 1
    %s30 = ssub.s32 %s24, 2
    %s31 = sadd.s32 %s24, 1
    %s33 = sadd.s32 %s32, 1
    %p36 = scmp.eq.s32.totalorder %s24, 4
    %p37 = scmp.ne.s32.totalorder %s32, %s34
    %p38 = scmp.eq.s32.totalorder %s24, 0
    %p39 = por %p37, %p38
    %p40 = scmp.ne.s32.totalorder %s32, %s34
    %p41 = scmp.eq.s32.totalorder %s29, 4
    %p42 = por %p40, %p41
    %p43 = scmp.ne.s32.totalorder %s34, %s35
    %p44 = scmp.eq.s32.totalorder %s29, 0
    %p45 = por %p43, %p44
    %p46 = scmp.ne.s32.totalorder %s34, %s35
    %p47 = scmp.eq.s32.totalorder %s30, 4
    %p48 = por %p46, %p47
    %p50 = scmp.ne.s32.totalorder %s35, %s49
    %p51 = scmp.eq.s32.totalorder %s30, 0
    %p52 = por %p50, %p51
    %s54 = sadd.s32 %s53, 1
    %p57 = scmp.eq.s32.totalorder %s24, 4
    %p58 = scmp.ne.s32.totalorder %s53, %s55
    %p59 = scmp.eq.s32.totalorder %s24, 0
    %p60 = por %p58, %p59
    %p61 = scmp.ne.s32.totalorder %s53, %s55
    %p62 = scmp.eq.s32.totalorder %s29, 4
    %p63 = por %p61, %p62
    %p64 = scmp.ne.s32.totalorder %s55, %s56
    %p65 = scmp.eq.s32.totalorder %s29, 0
    %p66 = por %p64, %p65
    %p67 = scmp.ne.s32.totalorder %s55, %s56
    %p68 = scmp.eq.s32.totalorder %s30, 4
    %p69 = por %p67, %p68
    %p71 = scmp.ne.s32.totalorder %s56, %s70
    %p72 = scmp.eq.s32.totalorder %s30, 0
    %p73 = por %p71, %p72
    %s74 = ssub.s32 %s24, %s31
    %p75 = scmp.eq.s32.totalorder %s74, 0
    %s77 = sadd.s32 %s76, 1
    %s78 = scalar_select %p75, %s76, %s77
    %p81 = pneg %p75
    %p82 = scmp.eq.s32.totalorder %s24, 4
    %p83 = por %p81, %p82
    %p84 = scmp.ne.s32.totalorder %s76, %s79
    %p85 = scmp.eq.s32.totalorder %s24, 0
    %p86 = por %p84, %p85
    %p87 = scmp.ne.s32.totalorder %s76, %s79
    %p88 = scmp.eq.s32.totalorder %s29, 4
    %p89 = por %p87, %p88
    %p90 = scmp.ne.s32.totalorder %s79, %s80
    %p91 = scmp.eq.s32.totalorder %s29, 0
    %p92 = por %p90, %p91
    %p93 = scmp.ne.s32.totalorder %s79, %s80
    %p94 = scmp.eq.s32.totalorder %s30, 4
    %p95 = por %p93, %p94
    %p97 = scmp.ne.s32.totalorder %s80, %s96
    %p98 = scmp.eq.s32.totalorder %s30, 0
    %p99 = por %p97, %p98
    %s100 = ssub.s32 %s24, %s31
    %p101 = scmp.eq.s32.totalorder %s100, 0
    %s103 = sadd.s32 %s102, 1
    %s104 = scalar_select %p101, %s102, %s103
    %p107 = pneg %p101
    %p108 = scmp.eq.s32.totalorder %s24, 4
    %p109 = por %p107, %p108
    %p110 = scmp.ne.s32.totalorder %s102, %s105
    %p111 = scmp.eq.s32.totalorder %s24, 0
    %p112 = por %p110, %p111
    %p113 = scmp.ne.s32.totalorder %s102, %s105
    %p114 = scmp.eq.s32.totalorder %s29, 4
    %p115 = por %p113, %p114
    %p116 = scmp.ne.s32.totalorder %s105, %s106
    %p117 = scmp.eq.s32.totalorder %s29, 0
    %p118 = por %p116, %p117
    %p119 = scmp.ne.s32.totalorder %s105, %s106
    %p120 = scmp.eq.s32.totalorder %s30, 4
    %p121 = por %p119, %p120
    %p123 = scmp.ne.s32.totalorder %s106, %s122
    %p124 = scmp.eq.s32.totalorder %s30, 0
    %p125 = por %p123, %p124
    %s126 = ssub.s32 %s24, %s31
    %p127 = scmp.eq.s32.totalorder %s126, 0
    %s129 = sadd.s32 %s128, 1
    %s130 = scalar_select %p127, %s128, %s129
    %p133 = pneg %p127
    %p134 = scmp.eq.s32.totalorder %s24, 4
    %p135 = por %p133, %p134
    %p136 = scmp.ne.s32.totalorder %s128, %s131
    %p137 = scmp.eq.s32.totalorder %s24, 0
    %p138 = por %p136, %p137
    %p139 = scmp.ne.s32.totalorder %s128, %s131
    %p140 = scmp.eq.s32.totalorder %s29, 4
    %p141 = por %p139, %p140
    %p142 = scmp.ne.s32.totalorder %s131, %s132
    %p143 = scmp.eq.s32.totalorder %s29, 0
    %p144 = por %p142, %p143
    %p145 = scmp.ne.s32.totalorder %s131, %s132
    %p146 = scmp.eq.s32.totalorder %s30, 4
    %p147 = por %p145, %p146
    %p149 = scmp.ne.s32.totalorder %s132, %s148
    %p150 = scmp.eq.s32.totalorder %s30, 0
    %p151 = por %p149, %p150
    %s152 = ssub.s32 %s24, %s31
    %p153 = scmp.eq.s32.totalorder %s152, 0
    %s155 = sadd.s32 %s154, 1
    %s156 = scalar_select %p153, %s154, %s155
    %p159 = pneg %p153
    %p160 = scmp.eq.s32.totalorder %s24, 4
    %p161 = por %p159, %p160
    %p162 = scmp.ne.s32.totalorder %s154, %s157
    %p163 = scmp.eq.s32.totalorder %s24, 0
    %p164 = por %p162, %p163
    %p165 = scmp.ne.s32.totalorder %s154, %s157
    %p166 = scmp.eq.s32.totalorder %s29, 4
    %p167 = por %p165, %p166
    %p168 = scmp.ne.s32.totalorder %s157, %s158
    %p169 = scmp.eq.s32.totalorder %s29, 0
    %p170 = por %p168, %p169
    %p171 = scmp.ne.s32.totalorder %s157, %s158
    %p172 = scmp.eq.s32.totalorder %s30, 4
    %p173 = por %p171, %p172
    %p175 = scmp.ne.s32.totalorder %s158, %s174
    %p176 = scmp.eq.s32.totalorder %s30, 0
    %p177 = por %p175, %p176
    %s178 = ssub.s32 %s24, %s31
    %p179 = scmp.eq.s32.totalorder %s178, 0
    %s181 = sadd.s32 %s180, 1
    %s182 = scalar_select %p179, %s180, %s181
    %p185 = pneg %p179
    %p186 = scmp.eq.s32.totalorder %s24, 4
    %p187 = por %p185, %p186
    %p188 = scmp.ne.s32.totalorder %s180, %s183
    %p189 = scmp.eq.s32.totalorder %s24, 0
    %p190 = por %p188, %p189
    %p191 = scmp.ne.s32.totalorder %s180, %s183
    %p192 = scmp.eq.s32.totalorder %s29, 4
    %p193 = por %p191, %p192
    %p194 = scmp.ne.s32.totalorder %s183, %s184
    %p195 = scmp.eq.s32.totalorder %s29, 0
    %p196 = por %p194, %p195
    %p197 = scmp.ne.s32.totalorder %s183, %s184
    %p198 = scmp.eq.s32.totalorder %s30, 4
    %p199 = por %p197, %p198
    %p201 = scmp.ne.s32.totalorder %s184, %s200
    %p202 = scmp.eq.s32.totalorder %s30, 0
    %p203 = por %p201, %p202
    %s204 = ssub.s32 %s24, %s31
    %p205 = scmp.eq.s32.totalorder %s204, 0
    %s207 = sadd.s32 %s206, 1
    %s208 = scalar_select %p205, %s206, %s207
    %p211 = pneg %p205
    %p212 = scmp.eq.s32.totalorder %s24, 4
    %p213 = por %p211, %p212
    %p214 = scmp.ne.s32.totalorder %s206, %s209
    %p215 = scmp.eq.s32.totalorder %s24, 0
    %p216 = por %p214, %p215
    %p217 = scmp.ne.s32.totalorder %s206, %s209
    %p218 = scmp.eq.s32.totalorder %s29, 4
    %p219 = por %p217, %p218
    %p220 = scmp.ne.s32.totalorder %s209, %s210
    %p221 = scmp.eq.s32.totalorder %s29, 0
    %p222 = por %p220, %p221
    %p223 = scmp.ne.s32.totalorder %s209, %s210
    %p224 = scmp.eq.s32.totalorder %s30, 4
    %p225 = por %p223, %p224
    %p227 = scmp.ne.s32.totalorder %s210, %s226
    %p228 = scmp.eq.s32.totalorder %s30, 0
    %p229 = por %p227, %p228
    %s230 = ssub.s32 %s24, %s31
    %p231 = scmp.eq.s32.totalorder %s230, 0
    %s233 = sadd.s32 %s232, 1
    %s234 = scalar_select %p231, %s232, %s233
    %p237 = pneg %p231
    %p238 = scmp.eq.s32.totalorder %s24, 4
    %p239 = por %p237, %p238
    %p240 = scmp.ne.s32.totalorder %s232, %s235
    %p241 = scmp.eq.s32.totalorder %s24, 0
    %p242 = por %p240, %p241
    %p243 = scmp.ne.s32.totalorder %s232, %s235
    %p244 = scmp.eq.s32.totalorder %s29, 4
    %p245 = por %p243, %p244
    %p246 = scmp.ne.s32.totalorder %s235, %s236
    %p247 = scmp.eq.s32.totalorder %s29, 0
    %p248 = por %p246, %p247
    %p249 = scmp.ne.s32.totalorder %s235, %s236
    %p250 = scmp.eq.s32.totalorder %s30, 4
    %p251 = por %p249, %p250
    %p253 = scmp.ne.s32.totalorder %s236, %s252
    %p254 = scmp.eq.s32.totalorder %s30, 0
    %p255 = por %p253, %p254
    %s257 = sadd.s32 %s256, 1
    %p260 = scmp.eq.s32.totalorder %s24, 4
    %p261 = scmp.ne.s32.totalorder %s256, %s258
    %p262 = scmp.eq.s32.totalorder %s24, 0
    %p263 = por %p261, %p262
    %p264 = scmp.ne.s32.totalorder %s256, %s258
    %p265 = scmp.eq.s32.totalorder %s29, 4
    %p266 = por %p264, %p265
    %p267 = scmp.ne.s32.totalorder %s258, %s259
    %p268 = scmp.eq.s32.totalorder %s29, 0
    %p269 = por %p267, %p268
    %p270 = scmp.ne.s32.totalorder %s258, %s259
    %p271 = scmp.eq.s32.totalorder %s30, 4
    %p272 = por %p270, %p271
    %p274 = scmp.ne.s32.totalorder %s259, %s273
    %p275 = scmp.eq.s32.totalorder %s30, 0
    %p276 = por %p274, %p275
    %s278 = sadd.s32 %s277, 1
    %p281 = scmp.eq.s32.totalorder %s24, 4
    %p282 = scmp.ne.s32.totalorder %s277, %s279
    %p283 = scmp.eq.s32.totalorder %s24, 0
    %p284 = por %p282, %p283
    %p285 = scmp.ne.s32.totalorder %s277, %s279
    %p286 = scmp.eq.s32.totalorder %s29, 4
    %p287 = por %p285, %p286
    %p288 = scmp.ne.s32.totalorder %s279, %s280
    %p289 = scmp.eq.s32.totalorder %s29, 0
    %p290 = por %p288, %p289
    %p291 = scmp.ne.s32.totalorder %s279, %s280
    %p292 = scmp.eq.s32.totalorder %s30, 4
    %p293 = por %p291, %p292
    %p295 = scmp.ne.s32.totalorder %s280, %s294
    %p296 = scmp.eq.s32.totalorder %s30, 0
    %p297 = por %p295, %p296
    %s299 = sadd.s32 %s298, 1
    %p302 = scmp.eq.s32.totalorder %s24, 4
    %p303 = scmp.ne.s32.totalorder %s298, %s300
    %p304 = scmp.eq.s32.totalorder %s24, 0
    %p305 = por %p303, %p304
    %p306 = scmp.ne.s32.totalorder %s298, %s300
    %p307 = scmp.eq.s32.totalorder %s29, 4
    %p308 = por %p306, %p307
    %p309 = scmp.ne.s32.totalorder %s300, %s301
    %p310 = scmp.eq.s32.totalorder %s29, 0
    %p311 = por %p309, %p310
    %p312 = scmp.ne.s32.totalorder %s300, %s301
    %p313 = scmp.eq.s32.totalorder %s30, 4
    %p314 = por %p312, %p313
    %p316 = scmp.ne.s32.totalorder %s301, %s315
    %p317 = scmp.eq.s32.totalorder %s30, 0
    %p318 = por %p316, %p317
    %s320 = sadd.s32 %s319, 1
    %p323 = scmp.eq.s32.totalorder %s24, 4
    %p324 = scmp.ne.s32.totalorder %s319, %s321
    %p325 = scmp.eq.s32.totalorder %s24, 0
    %p326 = por %p324, %p325
    %p327 = scmp.ne.s32.totalorder %s319, %s321
    %p328 = scmp.eq.s32.totalorder %s29, 4
    %p329 = por %p327, %p328
    %p330 = scmp.ne.s32.totalorder %s321, %s322
    %p331 = scmp.eq.s32.totalorder %s29, 0
    %p332 = por %p330, %p331
    %p333 = scmp.ne.s32.totalorder %s321, %s322
    %p334 = scmp.eq.s32.totalorder %s30, 4
    %p335 = por %p333, %p334
    %p337 = scmp.ne.s32.totalorder %s322, %s336
    %p338 = scmp.eq.s32.totalorder %s30, 0
    %p339 = por %p337, %p338
    %s341 = sadd.s32 %s340, 1
    %p344 = scmp.eq.s32.totalorder %s24, 4
    %p345 = scmp.ne.s32.totalorder %s340, %s342
    %p346 = scmp.eq.s32.totalorder %s24, 0
    %p347 = por %p345, %p346
    %p348 = scmp.ne.s32.totalorder %s340, %s342
    %p349 = scmp.eq.s32.totalorder %s29, 4
    %p350 = por %p348, %p349
    %p351 = scmp.ne.s32.totalorder %s342, %s343
    %p352 = scmp.eq.s32.totalorder %s29, 0
    %p353 = por %p351, %p352
    %p354 = scmp.ne.s32.totalorder %s342, %s343
    %p355 = scmp.eq.s32.totalorder %s30, 4
    %p356 = por %p354, %p355
    %p358 = scmp.ne.s32.totalorder %s343, %s357
    %p359 = scmp.eq.s32.totalorder %s30, 0
    %p360 = por %p358, %p359
    %s362 = sadd.s32 %s361, 1
    %p365 = scmp.eq.s32.totalorder %s24, 4
    %p366 = scmp.ne.s32.totalorder %s361, %s363
    %p367 = scmp.eq.s32.totalorder %s24, 0
    %p368 = por %p366, %p367
    %p369 = scmp.ne.s32.totalorder %s361, %s363
    %p370 = scmp.eq.s32.totalorder %s29, 4
    %p371 = por %p369, %p370
    %p372 = scmp.ne.s32.totalorder %s363, %s364
    %p373 = scmp.eq.s32.totalorder %s29, 0
    %p374 = por %p372, %p373
    %p375 = scmp.ne.s32.totalorder %s363, %s364
    %p376 = scmp.eq.s32.totalorder %s30, 4
    %p377 = por %p375, %p376
    %p379 = scmp.ne.s32.totalorder %s364, %s378
    %p380 = scmp.eq.s32.totalorder %s30, 0
    %p381 = por %p379, %p380
    %s383 = sadd.s32 %s382, 1
    %p386 = scmp.eq.s32.totalorder %s24, 4
    %p387 = scmp.ne.s32.totalorder %s382, %s384
    %p388 = scmp.eq.s32.totalorder %s24, 0
    %p389 = por %p387, %p388
    %p390 = scmp.ne.s32.totalorder %s382, %s384
    %p391 = scmp.eq.s32.totalorder %s29, 4
    %p392 = por %p390, %p391
    %p393 = scmp.ne.s32.totalorder %s384, %s385
    %p394 = scmp.eq.s32.totalorder %s29, 0
    %p395 = por %p393, %p394
    %p396 = scmp.ne.s32.totalorder %s384, %s385
    %p397 = scmp.eq.s32.totalorder %s30, 4
    %p398 = por %p396, %p397
    %p400 = scmp.ne.s32.totalorder %s385, %s399
    %p401 = scmp.eq.s32.totalorder %s30, 0
    %p402 = por %p400, %p401
    %s404 = sadd.s32 %s403, 1
    %p407 = scmp.eq.s32.totalorder %s24, 4
    %p408 = scmp.ne.s32.totalorder %s403, %s405
    %p409 = scmp.eq.s32.totalorder %s24, 0
    %p410 = por %p408, %p409
    %p411 = scmp.ne.s32.totalorder %s403, %s405
    %p412 = scmp.eq.s32.totalorder %s29, 4
    %p413 = por %p411, %p412
    %p414 = scmp.ne.s32.totalorder %s405, %s406
    %p415 = scmp.eq.s32.totalorder %s29, 0
    %p416 = por %p414, %p415
    %p417 = scmp.ne.s32.totalorder %s405, %s406
    %p418 = scmp.eq.s32.totalorder %s30, 4
    %p419 = por %p417, %p418
    %p421 = scmp.ne.s32.totalorder %s406, %s420
    %p422 = scmp.eq.s32.totalorder %s30, 0
    %p423 = por %p421, %p422
    %s425 = sadd.s32 %s424, 1
    %p428 = scmp.eq.s32.totalorder %s24, 4
    %p429 = scmp.ne.s32.totalorder %s424, %s426
    %p430 = scmp.eq.s32.totalorder %s24, 0
    %p431 = por %p429, %p430
    %p432 = scmp.ne.s32.totalorder %s424, %s426
    %p433 = scmp.eq.s32.totalorder %s29, 4
    %p434 = por %p432, %p433
    %p435 = scmp.ne.s32.totalorder %s426, %s427
    %p436 = scmp.eq.s32.totalorder %s29, 0
    %p437 = por %p435, %p436
    %p438 = scmp.ne.s32.totalorder %s426, %s427
    %p439 = scmp.eq.s32.totalorder %s30, 4
    %p440 = por %p438, %p439
    %p442 = scmp.ne.s32.totalorder %s427, %s441
    %p443 = scmp.eq.s32.totalorder %s30, 0
    %p444 = por %p442, %p443
    %p445 = scmp.le.s32.totalorder 1, %s24
    %p446 = scmp.lt.s32.totalorder %s24, 6
    %p447 = pnand %p445, %p446
    %p448 = pneg %p447
    // Predicated region
    $region9: #{ginet_forward.1} parent=5 // pred_check
      _
    $region10: #{ginet_forward.1} parent=5 // pred_check_branch
      %450 = sbr.rel (%p447) target = $region12
    $region11: #{ginet_forward.1} parent=5 // pred_region
      %s451 = ssub.s32 %s24, 1
      // Predicated region
      $region13: #{ginet_forward.1} parent=11 // pred_check
        %p452 = pneg %p45
      $region14: #{ginet_forward.1} parent=11 // pred_check_branch
        %454 = sbr.rel (%p452) target = $region16
      $region15: #{ginet_forward.1} parent=11 // pred_region
        _
      $region16: #{ginet_forward.1} parent=11 // pred_fallthru
        _
      // Predicated region
      $region17: #{ginet_forward.1} parent=11 // pred_check
        %p455 = pneg %p66
      $region18: #{ginet_forward.1} parent=11 // pred_check_branch
        %457 = sbr.rel (%p455) target = $region20
      $region19: #{ginet_forward.1} parent=11 // pred_region
        _
      $region20: #{ginet_forward.1} parent=11 // pred_fallthru
        _
      // Predicated region
      $region21: #{ginet_forward.1} parent=11 // pred_check
        %p458 = pneg %p269
      $region22: #{ginet_forward.1} parent=11 // pred_check_branch
        %460 = sbr.rel (%p458) target = $region24
      $region23: #{ginet_forward.1} parent=11 // pred_region
        _
      $region24: #{ginet_forward.1} parent=11 // pred_fallthru
        _
      // Predicated region
      $region25: #{ginet_forward.1} parent=11 // pred_check
        %p461 = pneg %p290
      $region26: #{ginet_forward.1} parent=11 // pred_check_branch
        %463 = sbr.rel (%p461) target = $region28
      $region27: #{ginet_forward.1} parent=11 // pred_region
        _
      $region28: #{ginet_forward.1} parent=11 // pred_fallthru
        _
      // Predicated region
      $region29: #{ginet_forward.1} parent=11 // pred_check
        %p464 = pneg %p311
      $region30: #{ginet_forward.1} parent=11 // pred_check_branch
        %466 = sbr.rel (%p464) target = $region32
      $region31: #{ginet_forward.1} parent=11 // pred_region
        _
      $region32: #{ginet_forward.1} parent=11 // pred_fallthru
        _
      // Predicated region
      $region33: #{ginet_forward.1} parent=11 // pred_check
        %p467 = pneg %p332
      $region34: #{ginet_forward.1} parent=11 // pred_check_branch
        %469 = sbr.rel (%p467) target = $region36
      $region35: #{ginet_forward.1} parent=11 // pred_region
        _
      $region36: #{ginet_forward.1} parent=11 // pred_fallthru
        _
      // Predicated region
      $region37: #{ginet_forward.1} parent=11 // pred_check
        %p470 = pneg %p353
      $region38: #{ginet_forward.1} parent=11 // pred_check_branch
        %472 = sbr.rel (%p470) target = $region40
      $region39: #{ginet_forward.1} parent=11 // pred_region
        _
      $region40: #{ginet_forward.1} parent=11 // pred_fallthru
        _
      // Predicated region
      $region41: #{ginet_forward.1} parent=11 // pred_check
        %p473 = pneg %p374
      $region42: #{ginet_forward.1} parent=11 // pred_check_branch
        %475 = sbr.rel (%p473) target = $region44
      $region43: #{ginet_forward.1} parent=11 // pred_region
        _
      $region44: #{ginet_forward.1} parent=11 // pred_fallthru
        _
      // Predicated region
      $region45: #{ginet_forward.1} parent=11 // pred_check
        %p476 = pneg %p395
      $region46: #{ginet_forward.1} parent=11 // pred_check_branch
        %478 = sbr.rel (%p476) target = $region48
      $region47: #{ginet_forward.1} parent=11 // pred_region
        _
      $region48: #{ginet_forward.1} parent=11 // pred_fallthru
        _
    $region12: #{ginet_forward.1} parent=5 // pred_fallthru
      _
    %p479 = scmp.lt.s32.totalorder %s24, 5
    // Predicated region
    $region49: #{ginet_forward.1} parent=5 // pred_check
      %p480 = pneg %p479
    $region50: #{ginet_forward.1} parent=5 // pred_check_branch
      %482 = sbr.rel (%p480) target = $region52
    $region51: #{ginet_forward.1} parent=5 // pred_region
      // Predicated region
      $region53: #{ginet_forward.1} parent=51 // pred_check
        %p483 = pneg %p86
      $region54: #{ginet_forward.1} parent=51 // pred_check_branch
        %485 = sbr.rel (%p483) target = $region56
      $region55: #{ginet_forward.1} parent=51 // pred_region
        %p486 = scmp.lt.s32.totalorder %s24, 4
        %s487 = scalar_select %p486, %s24, 4
        %s488 = smul.addr %s487, 16
        %s489 = smul.addr %s488, 8
        %s490 = scalar_lea.vmem %s2, %s489
      $region56: #{ginet_forward.1} parent=51 // pred_fallthru
        _
      // Predicated region
      $region57: #{ginet_forward.1} parent=51 // pred_check
        %p491 = pneg %p112
      $region58: #{ginet_forward.1} parent=51 // pred_check_branch
        %493 = sbr.rel (%p491) target = $region60
      $region59: #{ginet_forward.1} parent=51 // pred_region
        %p494 = scmp.lt.s32.totalorder %s24, 4
        %s495 = scalar_select %p494, %s24, 4
        %s496 = smul.addr %s495, 16
        %s497 = smul.addr %s496, 8
        %s498 = scalar_lea.vmem %s3, %s497
      $region60: #{ginet_forward.1} parent=51 // pred_fallthru
        _
      // Predicated region
      $region61: #{ginet_forward.1} parent=51 // pred_check
        %p499 = pneg %p138
      $region62: #{ginet_forward.1} parent=51 // pred_check_branch
        %501 = sbr.rel (%p499) target = $region64
      $region63: #{ginet_forward.1} parent=51 // pred_region
        %p502 = scmp.lt.s32.totalorder %s24, 4
        %s503 = scalar_select %p502, %s24, 4
        %s504 = scalar_lea.vmem %s4, %s503
      $region64: #{ginet_forward.1} parent=51 // pred_fallthru
        _
      // Predicated region
      $region65: #{ginet_forward.1} parent=51 // pred_check
        %p505 = pneg %p164
      $region66: #{ginet_forward.1} parent=51 // pred_check_branch
        %507 = sbr.rel (%p505) target = $region68
      $region67: #{ginet_forward.1} parent=51 // pred_region
        %p508 = scmp.lt.s32.totalorder %s24, 4
        %s509 = scalar_select %p508, %s24, 4
        %s510 = smul.addr %s509, 16
        %s511 = smul.addr %s510, 8
        %s512 = scalar_lea.vmem %s5, %s511
      $region68: #{ginet_forward.1} parent=51 // pred_fallthru
        _
      // Predicated region
      $region69: #{ginet_forward.1} parent=51 // pred_check
        %p513 = pneg %p190
      $region70: #{ginet_forward.1} parent=51 // pred_check_branch
        %515 = sbr.rel (%p513) target = $region72
      $region71: #{ginet_forward.1} parent=51 // pred_region
        %p516 = scmp.lt.s32.totalorder %s24, 4
        %s517 = scalar_select %p516, %s24, 4
        %s518 = scalar_lea.vmem %s6, %s517
      $region72: #{ginet_forward.1} parent=51 // pred_fallthru
        _
      // Predicated region
      $region73: #{ginet_forward.1} parent=51 // pred_check
        %p519 = pneg %p216
      $region74: #{ginet_forward.1} parent=51 // pred_check_branch
        %521 = sbr.rel (%p519) target = $region76
      $region75: #{ginet_forward.1} parent=51 // pred_region
        %p522 = scmp.lt.s32.totalorder %s24, 4
        %s523 = scalar_select %p522, %s24, 4
        %s524 = scalar_lea.vmem %s7, %s523
      $region76: #{ginet_forward.1} parent=51 // pred_fallthru
        _
      // Predicated region
      $region77: #{ginet_forward.1} parent=51 // pred_check
        %p525 = pneg %p242
      $region78: #{ginet_forward.1} parent=51 // pred_check_branch
        %527 = sbr.rel (%p525) target = $region80
      $region79: #{ginet_forward.1} parent=51 // pred_region
        %p528 = scmp.lt.s32.totalorder %s24, 4
        %s529 = scalar_select %p528, %s24, 4
        %s530 = scalar_lea.vmem %s8, %s529
      $region80: #{ginet_forward.1} parent=51 // pred_fallthru
        _
    $region52: #{ginet_forward.1} parent=5 // pred_fallthru
      _
    %p531 = scmp.le.s32.totalorder 1, %s24
    %p532 = scmp.lt.s32.totalorder %s24, 6
    %p533 = pnand %p531, %p532
    %p534 = pneg %p533
    // Predicated region
    $region81: #{ginet_forward.1} parent=5 // pred_check
      _
    $region82: #{ginet_forward.1} parent=5 // pred_check_branch
      %536 = sbr.rel (%p533) target = $region84
    $region83: #{ginet_forward.1} parent=5 // pred_region
      %s537 = ssub.s32 %s24, 1
      %p538 = pneg %p45
      %p539 = pneg %p42
      %p540 = pneg %p66
      %p541 = pneg %p63
      %p542 = scmp.lt.s32.totalorder %s29, 4
      %s543 = scalar_select %p542, %s29, 4
      %s544 = smul.addr %s543, 16
      %s545 = smul.addr %s544, 8
      %s546 = scalar_lea.vmem %s2, %s545
      %p547 = pneg %p92
      %p548 = pneg %p89
      %p549 = scmp.lt.s32.totalorder %s29, 4
      %s550 = scalar_select %p549, %s29, 4
      %s551 = smul.addr %s550, 16
      %s552 = smul.addr %s551, 8
      %s553 = scalar_lea.vmem %s3, %s552
      %p554 = pneg %p118
      %p555 = pneg %p115
      %p556 = scmp.lt.s32.totalorder %s29, 4
      %s557 = scalar_select %p556, %s29, 4
      %s558 = scalar_lea.vmem %s4, %s557
      %p559 = pneg %p144
      %p560 = pneg %p141
      %p561 = scmp.lt.s32.totalorder %s29, 4
      %s562 = scalar_select %p561, %s29, 4
      %s563 = smul.addr %s562, 16
      %s564 = smul.addr %s563, 8
      %s565 = scalar_lea.vmem %s5, %s564
      %p566 = pneg %p170
      %p567 = pneg %p167
      %p568 = scmp.lt.s32.totalorder %s29, 4
      %s569 = scalar_select %p568, %s29, 4
      %s570 = scalar_lea.vmem %s6, %s569
      %p571 = pneg %p196
      %p572 = pneg %p193
      %p573 = scmp.lt.s32.totalorder %s29, 4
      %s574 = scalar_select %p573, %s29, 4
      %s575 = scalar_lea.vmem %s7, %s574
      %p576 = pneg %p222
      %p577 = pneg %p219
      %p578 = scmp.lt.s32.totalorder %s29, 4
      %s579 = scalar_select %p578, %s29, 4
      %s580 = scalar_lea.vmem %s8, %s579
      %p581 = pneg %p248
      %p582 = pneg %p245
      %p583 = pneg %p269
      %p584 = pneg %p266
      %p585 = pneg %p290
      %p586 = pneg %p287
      %p587 = pneg %p311
      %p588 = pneg %p308
      %p589 = pneg %p332
      %p590 = pneg %p329
      %p591 = pneg %p353
      %p592 = pneg %p350
      %p593 = pneg %p374
      %p594 = pneg %p371
      %p595 = pneg %p395
      %p596 = pneg %p392
      %p597 = pneg %p416
      %p598 = pneg %p413
      %p599 = pneg %p437
      %p600 = pneg %p434
      %p601 = scmp.lt.s32.totalorder %s29, 4
      %s602 = scalar_select %p601, %s29, 4
      %s603 = smul.addr %s602, 16
      %s604 = smul.addr %s603, 8
      %s605 = scalar_lea.vmem %s2, %s604
      %p606 = scmp.lt.s32.totalorder %s29, 4
      %s607 = scalar_select %p606, %s29, 4
      %s608 = smul.addr %s607, 16
      %s609 = smul.addr %s608, 8
      %s610 = scalar_lea.vmem %s3, %s609
      %p611 = scmp.lt.s32.totalorder %s29, 4
      %s612 = scalar_select %p611, %s29, 4
      %s613 = scalar_lea.vmem %s4, %s612
      %p614 = scmp.lt.s32.totalorder %s29, 4
      %s615 = scalar_select %p614, %s29, 4
      %s616 = smul.addr %s615, 16
      %s617 = smul.addr %s616, 8
      %s618 = scalar_lea.vmem %s5, %s617
      %p619 = scmp.lt.s32.totalorder %s29, 4
      %s620 = scalar_select %p619, %s29, 4
      %s621 = scalar_lea.vmem %s6, %s620
      %p622 = scmp.lt.s32.totalorder %s29, 4
      %s623 = scalar_select %p622, %s29, 4
      %s624 = scalar_lea.vmem %s7, %s623
      %p625 = scmp.lt.s32.totalorder %s29, 4
      %s626 = scalar_select %p625, %s29, 4
      %s627 = scalar_lea.vmem %s8, %s626
      %p628 = scmp.eq.s32.totalorder %s29, 0
      // Predicated region
      $region85: #{ginet_forward.1} parent=83 // pred_check
        %p629 = pneg %p628
      $region86: #{ginet_forward.1} parent=83 // pred_check_branch
        %631 = sbr.rel (%p629) target = $region88
      $region87: #{ginet_forward.1} parent=83 // pred_region
        %v632 = vld [vmem:[%s0] sm:$0xff]
        %v633 = vld [vmem:[%s0 + $0x8] sm:$0xff]
        %v634 = vld [vmem:[%s0 + $0x10] sm:$0xff]
        %v635 = vld [vmem:[%s0 + $0x18] sm:$0xff]
        %v636 = vld [vmem:[%s0 + $0x20] sm:$0xff]
        %v637 = vld [vmem:[%s0 + $0x28] sm:$0xff]
        %v638 = vld [vmem:[%s0 + $0x30] sm:$0xff]
        %v639 = vld [vmem:[%s0 + $0x38] sm:$0xff]
        %v640 = vld [vmem:[%s0 + $0x40] sm:$0xff]
        %v641 = vld [vmem:[%s0 + $0x48] sm:$0xff]
        %v642 = vld [vmem:[%s0 + $0x50] sm:$0xff]
        %v643 = vld [vmem:[%s0 + $0x58] sm:$0xff]
        %v644 = vld [vmem:[%s0 + $0x60] sm:$0xff]
        %v645 = vld [vmem:[%s0 + $0x68] sm:$0xff]
        %v646 = vld [vmem:[%s0 + $0x70] sm:$0xff]
        %v647 = vld [vmem:[%s0 + $0x78] sm:$0xff]
        %648 = vst [vmem:[#allocation2] sm:$0xff] %v632
        %649 = vst [vmem:[#allocation2 + $0x8] sm:$0xff] %v633
        %650 = vst [vmem:[#allocation2 + $0x10] sm:$0xff] %v634
        %651 = vst [vmem:[#allocation2 + $0x18] sm:$0xff] %v635
        %652 = vst [vmem:[#allocation2 + $0x20] sm:$0xff] %v636
        %653 = vst [vmem:[#allocation2 + $0x28] sm:$0xff] %v637
        %654 = vst [vmem:[#allocation2 + $0x30] sm:$0xff] %v638
        %655 = vst [vmem:[#allocation2 + $0x38] sm:$0xff] %v639
        %656 = vst [vmem:[#allocation2 + $0x40] sm:$0xff] %v640
        %657 = vst [vmem:[#allocation2 + $0x48] sm:$0xff] %v641
        %658 = vst [vmem:[#allocation2 + $0x50] sm:$0xff] %v642
        %659 = vst [vmem:[#allocation2 + $0x58] sm:$0xff] %v643
        %660 = vst [vmem:[#allocation2 + $0x60] sm:$0xff] %v644
        %661 = vst [vmem:[#allocation2 + $0x68] sm:$0xff] %v645
        %662 = vst [vmem:[#allocation2 + $0x70] sm:$0xff] %v646
        %663 = vst [vmem:[#allocation2 + $0x78] sm:$0xff] %v647
      $region88: #{ginet_forward.1} parent=83 // pred_fallthru
        _
      %v664 = vlaneseq
      %v665 = vshrl.u32 %v664, 7
      %v666 = vadd.s32 %v665, 8
      %v667 = vadd.s32 %v665, 16
      %v668 = vadd.s32 %v665, 24
      %v669 = vadd.s32 %v665, 32
      %v670 = vadd.s32 %v665, 40
      %v671 = vadd.s32 %v665, 48
      %v672 = vadd.s32 %v665, 56
      %v673 = vadd.s32 %v665, 64
      %v674 = vadd.s32 %v665, 72
      %v675 = vadd.s32 %v665, 80
      %v676 = vadd.s32 %v665, 88
      %v677 = vadd.s32 %v665, 96
      %v678 = vadd.s32 %v665, 104
      %v679 = vadd.s32 %v665, 112
      %v680 = vadd.s32 %v665, 120
      %vm681 = vcmp.lt.s32.totalorder %v665, 16
      %vm682 = vcmp.lt.s32.totalorder %v666, 16
      %vm683 = vcmp.lt.s32.totalorder %v667, 16
      %vm684 = vcmp.lt.s32.totalorder %v668, 16
      %vm685 = vcmp.lt.s32.totalorder %v669, 16
      %vm686 = vcmp.lt.s32.totalorder %v670, 16
      %vm687 = vcmp.lt.s32.totalorder %v671, 16
      %vm688 = vcmp.lt.s32.totalorder %v672, 16
      %vm689 = vcmp.lt.s32.totalorder %v673, 16
      %vm690 = vcmp.lt.s32.totalorder %v674, 16
      %vm691 = vcmp.lt.s32.totalorder %v675, 16
      %vm692 = vcmp.lt.s32.totalorder %v676, 16
      %vm693 = vcmp.lt.s32.totalorder %v677, 16
      %vm694 = vcmp.lt.s32.totalorder %v678, 16
      %vm695 = vcmp.lt.s32.totalorder %v679, 16
      %vm696 = vcmp.lt.s32.totalorder %v680, 16
      %v697 = vsel %vm681, 1, 0
      %v698 = vsel %vm682, 1, 0
      %v699 = vsel %vm683, 1, 0
      %v700 = vsel %vm684, 1, 0
      %v701 = vsel %vm685, 1, 0
      %v702 = vsel %vm686, 1, 0
      %v703 = vsel %vm687, 1, 0
      %v704 = vsel %vm688, 1, 0
      %v705 = vsel %vm689, 1, 0
      %v706 = vsel %vm690, 1, 0
      %v707 = vsel %vm691, 1, 0
      %v708 = vsel %vm692, 1, 0
      %v709 = vsel %vm693, 1, 0
      %v710 = vsel %vm694, 1, 0
      %v711 = vsel %vm695, 1, 0
      %v712 = vsel %vm696, 1, 0
      %v713 = vcvt.s32.f32 %v697
      %v714 = vcvt.s32.f32 %v698
      %v715 = vcvt.s32.f32 %v699
      %v716 = vcvt.s32.f32 %v700
      %v717 = vcvt.s32.f32 %v701
      %v718 = vcvt.s32.f32 %v702
      %v719 = vcvt.s32.f32 %v703
      %v720 = vcvt.s32.f32 %v704
      %v721 = vcvt.s32.f32 %v705
      %v722 = vcvt.s32.f32 %v706
      %v723 = vcvt.s32.f32 %v707
      %v724 = vcvt.s32.f32 %v708
      %v725 = vcvt.s32.f32 %v709
      %v726 = vcvt.s32.f32 %v710
      %v727 = vcvt.s32.f32 %v711
      %v728 = vcvt.s32.f32 %v712
      %v729 = vld [vmem:[%s1] sm:$0xf]
      %v730 = vld [vmem:[%s1 + $0x4] sm:$0xf]
      %v731 = vld [vmem:[%s1 + $0x8] sm:$0xf]
      %v732 = vld [vmem:[%s1 + $0xc] sm:$0xf]
      %v733 = vld [vmem:[%s1 + $0x10] sm:$0xf]
      %v734 = vld [vmem:[%s1 + $0x14] sm:$0xf]
      %v735 = vld [vmem:[%s1 + $0x18] sm:$0xf]
      %v736 = vld [vmem:[%s1 + $0x1c] sm:$0xf]
      %v737 = vld [vmem:[%s1 + $0x20] sm:$0xf]
      %v738 = vld [vmem:[%s1 + $0x24] sm:$0xf]
      %v739 = vld [vmem:[%s1 + $0x28] sm:$0xf]
      %v740 = vld [vmem:[%s1 + $0x2c] sm:$0xf]
      %v741 = vld [vmem:[%s1 + $0x30] sm:$0xf]
      %v742 = vld [vmem:[%s1 + $0x34] sm:$0xf]
      %v743 = vld [vmem:[%s1 + $0x38] sm:$0xf]
      %v744 = vld [vmem:[%s1 + $0x3c] sm:$0xf]
      %v745 = vld [vmem:[#allocation2] sm:$0xff]
      %v746 = vld [vmem:[#allocation2 + $0x8] sm:$0xff]
      %v747 = vld [vmem:[#allocation2 + $0x10] sm:$0xff]
      %v748 = vld [vmem:[#allocation2 + $0x18] sm:$0xff]
      %v749 = vld [vmem:[#allocation2 + $0x20] sm:$0xff]
      %v750 = vld [vmem:[#allocation2 + $0x28] sm:$0xff]
      %v751 = vld [vmem:[#allocation2 + $0x30] sm:$0xff]
      %v752 = vld [vmem:[#allocation2 + $0x38] sm:$0xff]
      %v753 = vld [vmem:[#allocation2 + $0x40] sm:$0xff]
      %v754 = vld [vmem:[#allocation2 + $0x48] sm:$0xff]
      %v755 = vld [vmem:[#allocation2 + $0x50] sm:$0xff]
      %v756 = vld [vmem:[#allocation2 + $0x58] sm:$0xff]
      %v757 = vld [vmem:[#allocation2 + $0x60] sm:$0xff]
      %v758 = vld [vmem:[#allocation2 + $0x68] sm:$0xff]
      %v759 = vld [vmem:[#allocation2 + $0x70] sm:$0xff]
      %v760 = vld [vmem:[#allocation2 + $0x78] sm:$0xff]
      %v761 = vpack.c.bf16 %v746, %v745
      %v762 = vpack.c.bf16 %v748, %v747
      %v763 = vpack.c.bf16 %v750, %v749
      %v764 = vpack.c.bf16 %v752, %v751
      %v765 = vpack.c.bf16 %v754, %v753
      %v766 = vpack.c.bf16 %v756, %v755
      %v767 = vpack.c.bf16 %v758, %v757
      %v768 = vpack.c.bf16 %v760, %v759
      %v769 = vld [vmem:[%s605] sm:$0xff]
      %v770 = vld [vmem:[%s605 + $0x8] sm:$0xff]
      %v771 = vld [vmem:[%s605 + $0x10] sm:$0xff]
      %v772 = vld [vmem:[%s605 + $0x18] sm:$0xff]
      %v773 = vld [vmem:[%s605 + $0x20] sm:$0xff]
      %v774 = vld [vmem:[%s605 + $0x28] sm:$0xff]
      %v775 = vld [vmem:[%s605 + $0x30] sm:$0xff]
      %v776 = vld [vmem:[%s605 + $0x38] sm:$0xff]
      %v777 = vld [vmem:[%s605 + $0x40] sm:$0xff]
      %v778 = vld [vmem:[%s605 + $0x48] sm:$0xff]
      %v779 = vld [vmem:[%s605 + $0x50] sm:$0xff]
      %v780 = vld [vmem:[%s605 + $0x58] sm:$0xff]
      %v781 = vld [vmem:[%s605 + $0x60] sm:$0xff]
      %v782 = vld [vmem:[%s605 + $0x68] sm:$0xff]
      %v783 = vld [vmem:[%s605 + $0x70] sm:$0xff]
      %v784 = vld [vmem:[%s605 + $0x78] sm:$0xff]
      %v801 = vunpack.c.l.b16 %v729
      %v802 = vunpack.c.l.b16 %v730
      %v803 = vunpack.c.l.b16 %v731
      %v804 = vunpack.c.l.b16 %v732
      %v805 = vunpack.c.l.b16 %v733
      %v806 = vunpack.c.l.b16 %v734
      %v807 = vunpack.c.l.b16 %v735
      %v808 = vunpack.c.l.b16 %v736
      %v809 = vunpack.c.l.b16 %v737
      %v810 = vunpack.c.l.b16 %v738
      %v811 = vunpack.c.l.b16 %v739
      %v812 = vunpack.c.l.b16 %v740
      %v813 = vunpack.c.l.b16 %v741
      %v814 = vunpack.c.l.b16 %v742
      %v815 = vunpack.c.l.b16 %v743
      %v816 = vunpack.c.l.b16 %v744
      %v817 = vpack.c.b16 %v802, %v801
      %v818 = vpack.c.b16 %v804, %v803
      %v819 = vpack.c.b16 %v806, %v805
      %v820 = vpack.c.b16 %v808, %v807
      %v821 = vpack.c.b16 %v810, %v809
      %v822 = vpack.c.b16 %v812, %v811
      %v823 = vpack.c.b16 %v814, %v813
      %v824 = vpack.c.b16 %v816, %v815
      %833 = vmatpush.bf16.msra.mxu0 %v768
      %834 = vmatpush.bf16.msra.mxu0 %v767
      %835 = vmatpush.bf16.msra.mxu0 %v766
      %836 = vmatpush.bf16.msra.mxu0 %v765
      %837 = vmatpush.bf16.msra.mxu0 %v764
      %838 = vmatpush.bf16.msra.mxu0 %v763
      %839 = vmatpush.bf16.msra.mxu0 %v762
      %840 = vmatpush.bf16.msra.mxu0 %v761
      %841 = vmatmul.bf16.gmra.mxu0 %v817
      %v842 = vpop.f32.mrf.mxu0
      %v843 = vadd.f32 %v769, %v842
      %v844 = vpop.f32.mrf.mxu0
      %v845 = vadd.f32 %v770, %v844
      %846 = vmatmul.bf16.gmra.mxu0 %v818
      %v847 = vpop.f32.mrf.mxu0
      %v848 = vadd.f32 %v771, %v847
      %v849 = vpop.f32.mrf.mxu0
      %v850 = vadd.f32 %v772, %v849
      %851 = vmatmul.bf16.gmra.mxu0 %v819
      %v852 = vpop.f32.mrf.mxu0
      %v853 = vadd.f32 %v773, %v852
      %v854 = vpop.f32.mrf.mxu0
      %v855 = vadd.f32 %v774, %v854
      %856 = vmatmul.bf16.gmra.mxu0 %v820
      %v857 = vpop.f32.mrf.mxu0
      %v858 = vadd.f32 %v775, %v857
      %v859 = vpop.f32.mrf.mxu0
      %v860 = vadd.f32 %v776, %v859
      %861 = vmatmul.bf16.gmra.mxu0 %v821
      %v862 = vpop.f32.mrf.mxu0
      %v863 = vadd.f32 %v777, %v862
      %v864 = vpop.f32.mrf.mxu0
      %v865 = vadd.f32 %v778, %v864
      %866 = vmatmul.bf16.gmra.mxu0 %v822
      %v867 = vpop.f32.mrf.mxu0
      %v868 = vadd.f32 %v779, %v867
      %v869 = vpop.f32.mrf.mxu0
      %v870 = vadd.f32 %v780, %v869
      %871 = vmatmul.bf16.gmra.mxu0 %v823
      %v872 = vpop.f32.mrf.mxu0
      %v873 = vadd.f32 %v781, %v872
      %v874 = vpop.f32.mrf.mxu0
      %v875 = vadd.f32 %v782, %v874
      %876 = vmatmul.bf16.gmra.mxu0 %v824
      %v877 = vpop.f32.mrf.mxu0
      %v878 = vadd.f32 %v783, %v877
      %v879 = vpop.f32.mrf.mxu0
      %v880 = vadd.f32 %v784, %v879
      %881 = vdwg.mxu0
      %v882 = vld [vmem:[%s610] sm:$0xff]
      %v883 = vld [vmem:[%s610 + $0x8] sm:$0xff]
      %v884 = vld [vmem:[%s610 + $0x10] sm:$0xff]
      %v885 = vld [vmem:[%s610 + $0x18] sm:$0xff]
      %v886 = vld [vmem:[%s610 + $0x20] sm:$0xff]
      %v887 = vld [vmem:[%s610 + $0x28] sm:$0xff]
      %v888 = vld [vmem:[%s610 + $0x30] sm:$0xff]
      %v889 = vld [vmem:[%s610 + $0x38] sm:$0xff]
      %v890 = vld [vmem:[%s610 + $0x40] sm:$0xff]
      %v891 = vld [vmem:[%s610 + $0x48] sm:$0xff]
      %v892 = vld [vmem:[%s610 + $0x50] sm:$0xff]
      %v893 = vld [vmem:[%s610 + $0x58] sm:$0xff]
      %v894 = vld [vmem:[%s610 + $0x60] sm:$0xff]
      %v895 = vld [vmem:[%s610 + $0x68] sm:$0xff]
      %v896 = vld [vmem:[%s610 + $0x70] sm:$0xff]
      %v897 = vld [vmem:[%s610 + $0x78] sm:$0xff]
      %v898 = vld [vmem:[%s613] sm:$0x1]
      %v900 = vperm.slane %v898, 0
      %902 = vmatpush.msra.mxu0 %v897
      %903 = vmatpush.msra.mxu0 %v896
      %904 = vmatpush.msra.mxu0 %v895
      %905 = vmatpush.msra.mxu0 %v894
      %906 = vmatpush.msra.mxu0 %v893
      %907 = vmatpush.msra.mxu0 %v892
      %908 = vmatpush.msra.mxu0 %v891
      %909 = vmatpush.msra.mxu0 %v890
      %910 = vmatpush.msra.mxu0 %v889
      %911 = vmatpush.msra.mxu0 %v888
      %912 = vmatpush.msra.mxu0 %v887
      %913 = vmatpush.msra.mxu0 %v886
      %914 = vmatpush.msra.mxu0 %v885
      %915 = vmatpush.msra.mxu0 %v884
      %916 = vmatpush.msra.mxu0 %v883
      %917 = vmatpush.msra.mxu0 %v882
      %918 = vmatmul.f32.gmra.mxu0 %v843
      %v919 = vpop.f32.mrf.mxu0
      %v920 = vadd.f32 %v900, %v919
      %921 = vmatmul.f32.gmra.mxu0 %v845
      %v922 = vpop.f32.mrf.mxu0
      %v923 = vadd.f32 %v900, %v922
      %924 = vmatmul.f32.gmra.mxu0 %v848
      %v925 = vpop.f32.mrf.mxu0
      %v926 = vadd.f32 %v900, %v925
      %927 = vmatmul.f32.gmra.mxu0 %v850
      %v928 = vpop.f32.mrf.mxu0
      %v929 = vadd.f32 %v900, %v928
      %930 = vmatmul.f32.gmra.mxu0 %v853
      %v931 = vpop.f32.mrf.mxu0
      %v932 = vadd.f32 %v900, %v931
      %933 = vmatmul.f32.gmra.mxu0 %v855
      %v934 = vpop.f32.mrf.mxu0
      %v935 = vadd.f32 %v900, %v934
      %936 = vmatmul.f32.gmra.mxu0 %v858
      %v937 = vpop.f32.mrf.mxu0
      %v938 = vadd.f32 %v900, %v937
      %939 = vmatmul.f32.gmra.mxu0 %v860
      %v940 = vpop.f32.mrf.mxu0
      %v941 = vadd.f32 %v900, %v940
      %942 = vmatmul.f32.gmra.mxu0 %v863
      %v943 = vpop.f32.mrf.mxu0
      %v944 = vadd.f32 %v900, %v943
      %945 = vmatmul.f32.gmra.mxu0 %v865
      %v946 = vpop.f32.mrf.mxu0
      %v947 = vadd.f32 %v900, %v946
      %948 = vmatmul.f32.gmra.mxu0 %v868
      %v949 = vpop.f32.mrf.mxu0
      %v950 = vadd.f32 %v900, %v949
      %951 = vmatmul.f32.gmra.mxu0 %v870
      %v952 = vpop.f32.mrf.mxu0
      %v953 = vadd.f32 %v900, %v952
      %954 = vmatmul.f32.gmra.mxu0 %v873
      %v955 = vpop.f32.mrf.mxu0
      %v956 = vadd.f32 %v900, %v955
      %957 = vmatmul.f32.gmra.mxu0 %v875
      %v958 = vpop.f32.mrf.mxu0
      %v959 = vadd.f32 %v900, %v958
      %960 = vmatmul.f32.gmra.mxu0 %v878
      %v961 = vpop.f32.mrf.mxu0
      %v962 = vadd.f32 %v900, %v961
      %963 = vmatmul.f32.gmra.mxu0 %v880
      %v964 = vpop.f32.mrf.mxu0
      %v965 = vadd.f32 %v900, %v964
      %966 = vdwg.mxu0
      %v967 = vmax.f32 %v920, 0.0
      %v968 = vmax.f32 %v923, 0.0
      %v969 = vmax.f32 %v926, 0.0
      %v970 = vmax.f32 %v929, 0.0
      %v971 = vmax.f32 %v932, 0.0
      %v972 = vmax.f32 %v935, 0.0
      %v973 = vmax.f32 %v938, 0.0
      %v974 = vmax.f32 %v941, 0.0
      %v975 = vmax.f32 %v944, 0.0
      %v976 = vmax.f32 %v947, 0.0
      %v977 = vmax.f32 %v950, 0.0
      %v978 = vmax.f32 %v953, 0.0
      %v979 = vmax.f32 %v956, 0.0
      %v980 = vmax.f32 %v959, 0.0
      %v981 = vmax.f32 %v962, 0.0
      %v982 = vmax.f32 %v965, 0.0
      %v983 = vld [vmem:[%s618] sm:$0xff]
      %v984 = vld [vmem:[%s618 + $0x8] sm:$0xff]
      %v985 = vld [vmem:[%s618 + $0x10] sm:$0xff]
      %v986 = vld [vmem:[%s618 + $0x18] sm:$0xff]
      %v987 = vld [vmem:[%s618 + $0x20] sm:$0xff]
      %v988 = vld [vmem:[%s618 + $0x28] sm:$0xff]
      %v989 = vld [vmem:[%s618 + $0x30] sm:$0xff]
      %v990 = vld [vmem:[%s618 + $0x38] sm:$0xff]
      %v991 = vld [vmem:[%s618 + $0x40] sm:$0xff]
      %v992 = vld [vmem:[%s618 + $0x48] sm:$0xff]
      %v993 = vld [vmem:[%s618 + $0x50] sm:$0xff]
      %v994 = vld [vmem:[%s618 + $0x58] sm:$0xff]
      %v995 = vld [vmem:[%s618 + $0x60] sm:$0xff]
      %v996 = vld [vmem:[%s618 + $0x68] sm:$0xff]
      %v997 = vld [vmem:[%s618 + $0x70] sm:$0xff]
      %v998 = vld [vmem:[%s618 + $0x78] sm:$0xff]
      %v999 = vld [vmem:[%s621] sm:$0x1]
      %v1001 = vperm.slane %v999, 0
      %1003 = vmatpush.msra.mxu0 %v998
      %1004 = vmatpush.msra.mxu0 %v997
      %1005 = vmatpush.msra.mxu0 %v996
      %1006 = vmatpush.msra.mxu0 %v995
      %1007 = vmatpush.msra.mxu0 %v994
      %1008 = vmatpush.msra.mxu0 %v993
      %1009 = vmatpush.msra.mxu0 %v992
      %1010 = vmatpush.msra.mxu0 %v991
      %1011 = vmatpush.msra.mxu0 %v990
      %1012 = vmatpush.msra.mxu0 %v989
      %1013 = vmatpush.msra.mxu0 %v988
      %1014 = vmatpush.msra.mxu0 %v987
      %1015 = vmatpush.msra.mxu0 %v986
      %1016 = vmatpush.msra.mxu0 %v985
      %1017 = vmatpush.msra.mxu0 %v984
      %1018 = vmatpush.msra.mxu0 %v983
      %1019 = vmatmul.f32.gmra.mxu0 %v967
      %v1020 = vpop.f32.mrf.mxu0
      %v1021 = vadd.f32 %v1001, %v1020
      %1022 = vmatmul.f32.gmra.mxu0 %v968
      %v1023 = vpop.f32.mrf.mxu0
      %v1024 = vadd.f32 %v1001, %v1023
      %1025 = vmatmul.f32.gmra.mxu0 %v969
      %v1026 = vpop.f32.mrf.mxu0
      %v1027 = vadd.f32 %v1001, %v1026
      %1028 = vmatmul.f32.gmra.mxu0 %v970
      %v1029 = vpop.f32.mrf.mxu0
      %v1030 = vadd.f32 %v1001, %v1029
      %1031 = vmatmul.f32.gmra.mxu0 %v971
      %v1032 = vpop.f32.mrf.mxu0
      %v1033 = vadd.f32 %v1001, %v1032
      %1034 = vmatmul.f32.gmra.mxu0 %v972
      %v1035 = vpop.f32.mrf.mxu0
      %v1036 = vadd.f32 %v1001, %v1035
      %1037 = vmatmul.f32.gmra.mxu0 %v973
      %v1038 = vpop.f32.mrf.mxu0
      %v1039 = vadd.f32 %v1001, %v1038
      %1040 = vmatmul.f32.gmra.mxu0 %v974
      %v1041 = vpop.f32.mrf.mxu0
      %v1042 = vadd.f32 %v1001, %v1041
      %1043 = vmatmul.f32.gmra.mxu0 %v975
      %v1044 = vpop.f32.mrf.mxu0
      %v1045 = vadd.f32 %v1001, %v1044
      %1046 = vmatmul.f32.gmra.mxu0 %v976
      %v1047 = vpop.f32.mrf.mxu0
      %v1048 = vadd.f32 %v1001, %v1047
      %1049 = vmatmul.f32.gmra.mxu0 %v977
      %v1050 = vpop.f32.mrf.mxu0
      %v1051 = vadd.f32 %v1001, %v1050
      %1052 = vmatmul.f32.gmra.mxu0 %v978
      %v1053 = vpop.f32.mrf.mxu0
      %v1054 = vadd.f32 %v1001, %v1053
      %1055 = vmatmul.f32.gmra.mxu0 %v979
      %v1056 = vpop.f32.mrf.mxu0
      %v1057 = vadd.f32 %v1001, %v1056
      %1058 = vmatmul.f32.gmra.mxu0 %v980
      %v1059 = vpop.f32.mrf.mxu0
      %v1060 = vadd.f32 %v1001, %v1059
      %1061 = vmatmul.f32.gmra.mxu0 %v981
      %v1062 = vpop.f32.mrf.mxu0
      %v1063 = vadd.f32 %v1001, %v1062
      %1064 = vmatmul.f32.gmra.mxu0 %v982
      %v1065 = vpop.f32.mrf.mxu0
      %v1066 = vadd.f32 %v1001, %v1065
      %1067 = vdwg.mxu0
      %v1068 = vmul.f32 %v1021, %v713
      %v1069 = vmul.f32 %v1024, %v714
      %v1070 = vmul.f32 %v1027, %v715
      %v1071 = vmul.f32 %v1030, %v716
      %v1072 = vmul.f32 %v1033, %v717
      %v1073 = vmul.f32 %v1036, %v718
      %v1074 = vmul.f32 %v1039, %v719
      %v1075 = vmul.f32 %v1042, %v720
      %v1076 = vmul.f32 %v1045, %v721
      %v1077 = vmul.f32 %v1048, %v722
      %v1078 = vmul.f32 %v1051, %v723
      %v1079 = vmul.f32 %v1054, %v724
      %v1080 = vmul.f32 %v1057, %v725
      %v1081 = vmul.f32 %v1060, %v726
      %v1082 = vmul.f32 %v1063, %v727
      %v1083 = vmul.f32 %v1066, %v728
      %v1084 = vadd.f32 %v1068, %v1069
      %v1085 = vadd.f32 %v1084, %v1070
      %v1086 = vadd.f32 %v1085, %v1071
      %v1087 = vadd.f32 %v1086, %v1072
      %v1088 = vadd.f32 %v1087, %v1073
      %v1089 = vadd.f32 %v1088, %v1074
      %v1090 = vadd.f32 %v1089, %v1075
      %v1091 = vadd.f32 %v1090, %v1076
      %v1092 = vadd.f32 %v1091, %v1077
      %v1093 = vadd.f32 %v1092, %v1078
      %v1094 = vadd.f32 %v1093, %v1079
      %v1095 = vadd.f32 %v1094, %v1080
      %v1096 = vadd.f32 %v1095, %v1081
      %v1097 = vadd.f32 %v1096, %v1082
      %v1098 = vadd.f32 %v1097, %v1083
      %v1099 = vrot.slane %v1098, 4
      %v1100 = vadd.f32 %v1098, %v1099
      %v1101 = vrot.slane %v1100, 2
      %v1102 = vadd.f32 %v1100, %v1101
      %v1103 = vrot.slane %v1102, 1
      %v1104 = vadd.f32 %v1102, %v1103
      %v1105 = vmul.f32 %v1068, %v1068
      %v1106 = vmul.f32 %v1069, %v1069
      %v1107 = vmul.f32 %v1070, %v1070
      %v1108 = vmul.f32 %v1071, %v1071
      %v1109 = vmul.f32 %v1072, %v1072
      %v1110 = vmul.f32 %v1073, %v1073
      %v1111 = vmul.f32 %v1074, %v1074
      %v1112 = vmul.f32 %v1075, %v1075
      %v1113 = vmul.f32 %v1076, %v1076
      %v1114 = vmul.f32 %v1077, %v1077
      %v1115 = vmul.f32 %v1078, %v1078
      %v1116 = vmul.f32 %v1079, %v1079
      %v1117 = vmul.f32 %v1080, %v1080
      %v1118 = vmul.f32 %v1081, %v1081
      %v1119 = vmul.f32 %v1082, %v1082
      %v1120 = vmul.f32 %v1083, %v1083
      %v1121 = vadd.f32 %v1105, %v1106
      %v1122 = vadd.f32 %v1121, %v1107
      %v1123 = vadd.f32 %v1122, %v1108
      %v1124 = vadd.f32 %v1123, %v1109
      %v1125 = vadd.f32 %v1124, %v1110
      %v1126 = vadd.f32 %v1125, %v1111
      %v1127 = vadd.f32 %v1126, %v1112
      %v1128 = vadd.f32 %v1127, %v1113
      %v1129 = vadd.f32 %v1128, %v1114
      %v1130 = vadd.f32 %v1129, %v1115
      %v1131 = vadd.f32 %v1130, %v1116
      %v1132 = vadd.f32 %v1131, %v1117
      %v1133 = vadd.f32 %v1132, %v1118
      %v1134 = vadd.f32 %v1133, %v1119
      %v1135 = vadd.f32 %v1134, %v1120
      %v1136 = vrot.slane %v1135, 4
      %v1137 = vadd.f32 %v1135, %v1136
      %v1138 = vrot.slane %v1137, 2
      %v1139 = vadd.f32 %v1137, %v1138
      %v1140 = vrot.slane %v1139, 1
      %v1141 = vadd.f32 %v1139, %v1140
      %v1142 = vmul.f32 %v1104, 0.0625
      %v1143 = vmul.f32 %v1141, 0.0625
      %v1144 = vmul.f32 %v1142, %v1142
      %v1145 = vsub.f32 %v1143, %v1144
      %v1146 = vsub.f32 %v1021, %v1142
      %v1147 = vsub.f32 %v1024, %v1142
      %v1148 = vsub.f32 %v1027, %v1142
      %v1149 = vsub.f32 %v1030, %v1142
      %v1150 = vsub.f32 %v1033, %v1142
      %v1151 = vsub.f32 %v1036, %v1142
      %v1152 = vsub.f32 %v1039, %v1142
      %v1153 = vsub.f32 %v1042, %v1142
      %v1154 = vsub.f32 %v1045, %v1142
      %v1155 = vsub.f32 %v1048, %v1142
      %v1156 = vsub.f32 %v1051, %v1142
      %v1157 = vsub.f32 %v1054, %v1142
      %v1158 = vsub.f32 %v1057, %v1142
      %v1159 = vsub.f32 %v1060, %v1142
      %v1160 = vsub.f32 %v1063, %v1142
      %v1161 = vsub.f32 %v1066, %v1142
      %v1162 = vadd.f32 %v1145, 1e-05
      %v1163 = vrsqrt.pop %v1162
      %v1164 = vmul.f32 %v1163, %v1162
      %v1165 = vmul.f32 %v1164, %v1163
      %v1166 = vmul.f32 0.5, %v1165
      %v1167 = vsub.f32 1.5, %v1166
      %v1168 = vmul.f32 %v1163, %v1167
      %vm1169 = vweird.f32 %v1162
      %vm1170 = vweird.f32 %v1163
      %vm1171 = vmor %vm1169, %vm1170
      %v1172 = vsel %vm1171, %v1163, %v1168
      %v1173 = vmul.f32 %v1146, %v1172
      %v1174 = vmul.f32 %v1147, %v1172
      %v1175 = vmul.f32 %v1148, %v1172
      %v1176 = vmul.f32 %v1149, %v1172
      %v1177 = vmul.f32 %v1150, %v1172
      %v1178 = vmul.f32 %v1151, %v1172
      %v1179 = vmul.f32 %v1152, %v1172
      %v1180 = vmul.f32 %v1153, %v1172
      %v1181 = vmul.f32 %v1154, %v1172
      %v1182 = vmul.f32 %v1155, %v1172
      %v1183 = vmul.f32 %v1156, %v1172
      %v1184 = vmul.f32 %v1157, %v1172
      %v1185 = vmul.f32 %v1158, %v1172
      %v1186 = vmul.f32 %v1159, %v1172
      %v1187 = vmul.f32 %v1160, %v1172
      %v1188 = vmul.f32 %v1161, %v1172
      %v1189 = vld [vmem:[%s624] sm:$0x1]
      %v1191 = vperm.slane %v1189, 0
      %v1193 = vmul.f32 %v1173, %v1191
      %v1194 = vmul.f32 %v1174, %v1191
      %v1195 = vmul.f32 %v1175, %v1191
      %v1196 = vmul.f32 %v1176, %v1191
      %v1197 = vmul.f32 %v1177, %v1191
      %v1198 = vmul.f32 %v1178, %v1191
      %v1199 = vmul.f32 %v1179, %v1191
      %v1200 = vmul.f32 %v1180, %v1191
      %v1201 = vmul.f32 %v1181, %v1191
      %v1202 = vmul.f32 %v1182, %v1191
      %v1203 = vmul.f32 %v1183, %v1191
      %v1204 = vmul.f32 %v1184, %v1191
      %v1205 = vmul.f32 %v1185, %v1191
      %v1206 = vmul.f32 %v1186, %v1191
      %v1207 = vmul.f32 %v1187, %v1191
      %v1208 = vmul.f32 %v1188, %v1191
      %v1209 = vld [vmem:[%s627] sm:$0x1]
      %v1211 = vperm.slane %v1209, 0
      %v1213 = vadd.f32 %v1193, %v1211
      %v1214 = vadd.f32 %v1194, %v1211
      %v1215 = vadd.f32 %v1195, %v1211
      %v1216 = vadd.f32 %v1196, %v1211
      %v1217 = vadd.f32 %v1197, %v1211
      %v1218 = vadd.f32 %v1198, %v1211
      %v1219 = vadd.f32 %v1199, %v1211
      %v1220 = vadd.f32 %v1200, %v1211
      %v1221 = vadd.f32 %v1201, %v1211
      %v1222 = vadd.f32 %v1202, %v1211
      %v1223 = vadd.f32 %v1203, %v1211
      %v1224 = vadd.f32 %v1204, %v1211
      %v1225 = vadd.f32 %v1205, %v1211
      %v1226 = vadd.f32 %v1206, %v1211
      %v1227 = vadd.f32 %v1207, %v1211
      %v1228 = vadd.f32 %v1208, %v1211
      %p1229 = scmp.lt.s32.totalorder %s29, 4
      %v1230 = vmax.f32 %v1213, 0.0
      %v1231 = vmax.f32 %v1214, 0.0
      %v1232 = vmax.f32 %v1215, 0.0
      %v1233 = vmax.f32 %v1216, 0.0
      %v1234 = vmax.f32 %v1217, 0.0
      %v1235 = vmax.f32 %v1218, 0.0
      %v1236 = vmax.f32 %v1219, 0.0
      %v1237 = vmax.f32 %v1220, 0.0
      %v1238 = vmax.f32 %v1221, 0.0
      %v1239 = vmax.f32 %v1222, 0.0
      %v1240 = vmax.f32 %v1223, 0.0
      %v1241 = vmax.f32 %v1224, 0.0
      %v1242 = vmax.f32 %v1225, 0.0
      %v1243 = vmax.f32 %v1226, 0.0
      %v1244 = vmax.f32 %v1227, 0.0
      %v1245 = vmax.f32 %v1228, 0.0
      %s1246 = scalar_select %p1229, 1, 0
      %v1247 = vstv %s1246
      %vm1248 = vcmp.eq.s32.totalorder %v1247, 1
      %v1249 = vsel %vm1248, %v1230, %v1213
      %v1250 = vsel %vm1248, %v1231, %v1214
      %v1251 = vsel %vm1248, %v1232, %v1215
      %v1252 = vsel %vm1248, %v1233, %v1216
      %v1253 = vsel %vm1248, %v1234, %v1217
      %v1254 = vsel %vm1248, %v1235, %v1218
      %v1255 = vsel %vm1248, %v1236, %v1219
      %v1256 = vsel %vm1248, %v1237, %v1220
      %v1257 = vsel %vm1248, %v1238, %v1221
      %v1258 = vsel %vm1248, %v1239, %v1222
      %v1259 = vsel %vm1248, %v1240, %v1223
      %v1260 = vsel %vm1248, %v1241, %v1224
      %v1261 = vsel %vm1248, %v1242, %v1225
      %v1262 = vsel %vm1248, %v1243, %v1226
      %v1263 = vsel %vm1248, %v1244, %v1227
      %v1264 = vsel %vm1248, %v1245, %v1228
      %v1265 = vmul.f32 %v1249, %v713
      %v1266 = vmul.f32 %v1250, %v714
      %v1267 = vmul.f32 %v1251, %v715
      %v1268 = vmul.f32 %v1252, %v716
      %v1269 = vmul.f32 %v1253, %v717
      %v1270 = vmul.f32 %v1254, %v718
      %v1271 = vmul.f32 %v1255, %v719
      %v1272 = vmul.f32 %v1256, %v720
      %v1273 = vmul.f32 %v1257, %v721
      %v1274 = vmul.f32 %v1258, %v722
      %v1275 = vmul.f32 %v1259, %v723
      %v1276 = vmul.f32 %v1260, %v724
      %v1277 = vmul.f32 %v1261, %v725
      %v1278 = vmul.f32 %v1262, %v726
      %v1279 = vmul.f32 %v1263, %v727
      %v1280 = vmul.f32 %v1264, %v728
      %1281 = vst [vmem:[#allocation2] sm:$0xff] %v1265
      %1282 = vst [vmem:[#allocation2 + $0x8] sm:$0xff] %v1266
      %1283 = vst [vmem:[#allocation2 + $0x10] sm:$0xff] %v1267
      %1284 = vst [vmem:[#allocation2 + $0x18] sm:$0xff] %v1268
      %1285 = vst [vmem:[#allocation2 + $0x20] sm:$0xff] %v1269
      %1286 = vst [vmem:[#allocation2 + $0x28] sm:$0xff] %v1270
      %1287 = vst [vmem:[#allocation2 + $0x30] sm:$0xff] %v1271
      %1288 = vst [vmem:[#allocation2 + $0x38] sm:$0xff] %v1272
      %1289 = vst [vmem:[#allocation2 + $0x40] sm:$0xff] %v1273
      %1290 = vst [vmem:[#allocation2 + $0x48] sm:$0xff] %v1274
      %1291 = vst [vmem:[#allocation2 + $0x50] sm:$0xff] %v1275
      %1292 = vst [vmem:[#allocation2 + $0x58] sm:$0xff] %v1276
      %1293 = vst [vmem:[#allocation2 + $0x60] sm:$0xff] %v1277
      %1294 = vst [vmem:[#allocation2 + $0x68] sm:$0xff] %v1278
      %1295 = vst [vmem:[#allocation2 + $0x70] sm:$0xff] %v1279
      %1296 = vst [vmem:[#allocation2 + $0x78] sm:$0xff] %v1280
      %p1297 = scmp.eq.s32.totalorder %s29, 4
      // Predicated region
      $region89: #{ginet_forward.1} parent=83 // pred_check
        %p1298 = pneg %p1297
      $region90: #{ginet_forward.1} parent=83 // pred_check_branch
        %1300 = sbr.rel (%p1298) target = $region92
      $region91: #{ginet_forward.1} parent=83 // pred_region
        %v1301 = vld [vmem:[%s9] sm:$0xff]
        %1302 = vmatpush.msra.mxu0 %v1280
        %1303 = vmatpush.msra.mxu0 %v1279
        %1304 = vmatpush.msra.mxu0 %v1278
        %1305 = vmatpush.msra.mxu0 %v1277
        %1306 = vmatpush.msra.mxu0 %v1276
        %1307 = vmatpush.msra.mxu0 %v1275
        %1308 = vmatpush.msra.mxu0 %v1274
        %1309 = vmatpush.msra.mxu0 %v1273
        %1310 = vmatpush.msra.mxu0 %v1272
        %1311 = vmatpush.msra.mxu0 %v1271
        %1312 = vmatpush.msra.mxu0 %v1270
        %1313 = vmatpush.msra.mxu0 %v1269
        %1314 = vmatpush.msra.mxu0 %v1268
        %1315 = vmatpush.msra.mxu0 %v1267
        %1316 = vmatpush.msra.mxu0 %v1266
        %1317 = vmatpush.msra.mxu0 %v1265
        %1318 = vmatmul.f32.gmra.mxu0 %v1301
        %v1319 = vpop.f32.mrf.mxu0
        %v1320 = vadd.f32 0.0, %v1319
        %1321 = vdwg.mxu0
        %v1322 = vld [vmem:[%s10] sm:$0xff]
        %v1323 = vld [vmem:[%s10 + $0x8] sm:$0xff]
        %v1324 = vld [vmem:[%s10 + $0x10] sm:$0xff]
        %v1325 = vld [vmem:[%s10 + $0x18] sm:$0xff]
        %v1326 = vld [vmem:[%s10 + $0x20] sm:$0xff]
        %v1327 = vld [vmem:[%s10 + $0x28] sm:$0xff]
        %v1328 = vld [vmem:[%s10 + $0x30] sm:$0xff]
        %v1329 = vld [vmem:[%s10 + $0x38] sm:$0xff]
        %v1330 = vld [vmem:[%s10 + $0x40] sm:$0xff]
        %v1331 = vld [vmem:[%s10 + $0x48] sm:$0xff]
        %v1332 = vld [vmem:[%s10 + $0x50] sm:$0xff]
        %v1333 = vld [vmem:[%s10 + $0x58] sm:$0xff]
        %v1334 = vld [vmem:[%s10 + $0x60] sm:$0xff]
        %v1335 = vld [vmem:[%s10 + $0x68] sm:$0xff]
        %v1336 = vld [vmem:[%s10 + $0x70] sm:$0xff]
        %v1337 = vld [vmem:[%s10 + $0x78] sm:$0xff]
        %v1338 = vld [vmem:[%s11] sm:$0x1]
        %v1340 = vperm.slane %v1338, 0
        %1342 = vmatpush.msra.mxu0 %v1337
        %1343 = vmatpush.msra.mxu0 %v1336
        %1344 = vmatpush.msra.mxu0 %v1335
        %1345 = vmatpush.msra.mxu0 %v1334
        %1346 = vmatpush.msra.mxu0 %v1333
        %1347 = vmatpush.msra.mxu0 %v1332
        %1348 = vmatpush.msra.mxu0 %v1331
        %1349 = vmatpush.msra.mxu0 %v1330
        %1350 = vmatpush.msra.mxu0 %v1329
        %1351 = vmatpush.msra.mxu0 %v1328
        %1352 = vmatpush.msra.mxu0 %v1327
        %1353 = vmatpush.msra.mxu0 %v1326
        %1354 = vmatpush.msra.mxu0 %v1325
        %1355 = vmatpush.msra.mxu0 %v1324
        %1356 = vmatpush.msra.mxu0 %v1323
        %1357 = vmatpush.msra.mxu0 %v1322
        %1358 = vmatmul.f32.gmra.mxu0 %v1320
        %v1359 = vpop.f32.mrf.mxu0
        %v1360 = vadd.f32 %v1340, %v1359
        %1361 = vdwg.mxu0
        %1362 = vst [vmem:[%s16] sm:$0xff] %v1360
        %v1363 = vld [vmem:[%s12] sm:$0xff]
        %v1364 = vld [vmem:[%s12 + $0x8] sm:$0xff]
        %v1365 = vld [vmem:[%s12 + $0x10] sm:$0xff]
        %v1366 = vld [vmem:[%s12 + $0x18] sm:$0xff]
        %v1367 = vld [vmem:[%s12 + $0x20] sm:$0xff]
        %v1368 = vld [vmem:[%s12 + $0x28] sm:$0xff]
        %v1369 = vld [vmem:[%s12 + $0x30] sm:$0xff]
        %v1370 = vld [vmem:[%s12 + $0x38] sm:$0xff]
        %v1371 = vld [vmem:[%s12 + $0x40] sm:$0xff]
        %v1372 = vld [vmem:[%s12 + $0x48] sm:$0xff]
        %v1373 = vld [vmem:[%s12 + $0x50] sm:$0xff]
        %v1374 = vld [vmem:[%s12 + $0x58] sm:$0xff]
        %v1375 = vld [vmem:[%s12 + $0x60] sm:$0xff]
        %v1376 = vld [vmem:[%s12 + $0x68] sm:$0xff]
        %v1377 = vld [vmem:[%s12 + $0x70] sm:$0xff]
        %v1378 = vld [vmem:[%s12 + $0x78] sm:$0xff]
        %v1379 = vld [vmem:[%s13] sm:$0x1]
        %v1381 = vperm.slane %v1379, 0
        %1383 = vmatpush.msra.mxu0 %v1378
        %1384 = vmatpush.msra.mxu0 %v1377
        %1385 = vmatpush.msra.mxu0 %v1376
        %1386 = vmatpush.msra.mxu0 %v1375
        %1387 = vmatpush.msra.mxu0 %v1374
        %1388 = vmatpush.msra.mxu0 %v1373
        %1389 = vmatpush.msra.mxu0 %v1372
        %1390 = vmatpush.msra.mxu0 %v1371
        %1391 = vmatpush.msra.mxu0 %v1370
        %1392 = vmatpush.msra.mxu0 %v1369
        %1393 = vmatpush.msra.mxu0 %v1368
        %1394 = vmatpush.msra.mxu0 %v1367
        %1395 = vmatpush.msra.mxu0 %v1366
        %1396 = vmatpush.msra.mxu0 %v1365
        %1397 = vmatpush.msra.mxu0 %v1364
        %1398 = vmatpush.msra.mxu0 %v1363
        %1399 = vmatmul.f32.gmra.mxu0 %v1360
        %v1400 = vpop.f32.mrf.mxu0
        %v1401 = vadd.f32 %v1381, %v1400
        %1402 = vdwg.mxu0
        %v1403 = vmax.f32 %v1401, 0.0
        %v1404 = vld [vmem:[%s14] sm:$0xff]
        %v1405 = vld [vmem:[%s14 + $0x8] sm:$0xff]
        %v1406 = vld [vmem:[%s14 + $0x10] sm:$0xff]
        %v1407 = vld [vmem:[%s14 + $0x18] sm:$0xff]
        %v1408 = vld [vmem:[%s14 + $0x20] sm:$0xff]
        %v1409 = vld [vmem:[%s14 + $0x28] sm:$0xff]
        %v1410 = vld [vmem:[%s14 + $0x30] sm:$0xff]
        %v1411 = vld [vmem:[%s14 + $0x38] sm:$0xff]
        %v1412 = vld [vmem:[%s14 + $0x40] sm:$0xff]
        %v1413 = vld [vmem:[%s14 + $0x48] sm:$0xff]
        %v1414 = vld [vmem:[%s14 + $0x50] sm:$0xff]
        %v1415 = vld [vmem:[%s14 + $0x58] sm:$0xff]
        %v1416 = vld [vmem:[%s14 + $0x60] sm:$0xff]
        %v1417 = vld [vmem:[%s14 + $0x68] sm:$0xff]
        %v1418 = vld [vmem:[%s14 + $0x70] sm:$0xff]
        %v1419 = vld [vmem:[%s14 + $0x78] sm:$0xff]
        %v1420 = vld [vmem:[%s15] sm:$0x1]
        %v1422 = vperm.slane %v1420, 0
        %1424 = vmatpush.msra.mxu0 %v1419
        %1425 = vmatpush.msra.mxu0 %v1418
        %1426 = vmatpush.msra.mxu0 %v1417
        %1427 = vmatpush.msra.mxu0 %v1416
        %1428 = vmatpush.msra.mxu0 %v1415
        %1429 = vmatpush.msra.mxu0 %v1414
        %1430 = vmatpush.msra.mxu0 %v1413
        %1431 = vmatpush.msra.mxu0 %v1412
        %1432 = vmatpush.msra.mxu0 %v1411
        %1433 = vmatpush.msra.mxu0 %v1410
        %1434 = vmatpush.msra.mxu0 %v1409
        %1435 = vmatpush.msra.mxu0 %v1408
        %1436 = vmatpush.msra.mxu0 %v1407
        %1437 = vmatpush.msra.mxu0 %v1406
        %1438 = vmatpush.msra.mxu0 %v1405
        %1439 = vmatpush.msra.mxu0 %v1404
        %1440 = vmatmul.f32.gmra.mxu0 %v1403
        %v1441 = vpop.f32.mrf.mxu0
        %v1442 = vadd.f32 %v1422, %v1441
        %1443 = vdwg.mxu0
        %1444 = vst [vmem:[%s17] sm:$0xff] %v1442
      $region92: #{ginet_forward.1} parent=83 // pred_fallthru
        _
      // Predicated region
      $region93: #{ginet_forward.1} parent=83 // pred_check
        %p1445 = pneg %p413
      $region94: #{ginet_forward.1} parent=83 // pred_check_branch
        %1447 = sbr.rel (%p1445) target = $region96
      $region95: #{ginet_forward.1} parent=83 // pred_region
        _
      $region96: #{ginet_forward.1} parent=83 // pred_fallthru
        _
      // Predicated region
      $region97: #{ginet_forward.1} parent=83 // pred_check
        %p1448 = pneg %p434
      $region98: #{ginet_forward.1} parent=83 // pred_check_branch
        %1450 = sbr.rel (%p1448) target = $region100
      $region99: #{ginet_forward.1} parent=83 // pred_region
        _
      $region100: #{ginet_forward.1} parent=83 // pred_fallthru
        _
      // Predicated region
      $region101: #{ginet_forward.1} parent=83 // pred_check
        %p1451 = pneg %p413
      $region102: #{ginet_forward.1} parent=83 // pred_check_branch
        %1453 = sbr.rel (%p1451) target = $region104
      $region103: #{ginet_forward.1} parent=83 // pred_region
        _
      $region104: #{ginet_forward.1} parent=83 // pred_fallthru
        _
      // Predicated region
      $region105: #{ginet_forward.1} parent=83 // pred_check
        %p1454 = pneg %p434
      $region106: #{ginet_forward.1} parent=83 // pred_check_branch
        %1456 = sbr.rel (%p1454) target = $region108
      $region107: #{ginet_forward.1} parent=83 // pred_region
        _
      $region108: #{ginet_forward.1} parent=83 // pred_fallthru
        _
    $region84: #{ginet_forward.1} parent=5 // pred_fallthru
      _
    %p1457 = scmp.le.s32.totalorder 2, %s24
    // Predicated region
    $region109: #{ginet_forward.1} parent=5 // pred_check
      %p1458 = pneg %p1457
    $region110: #{ginet_forward.1} parent=5 // pred_check_branch
      %1460 = sbr.rel (%p1458) target = $region112
    $region111: #{ginet_forward.1} parent=5 // pred_region
      %s1461 = ssub.s32 %s24, 2
    $region112: #{ginet_forward.1} parent=5 // pred_fallthru
      _
  $region6: #{ginet_forward.1} parent=0 // loop_footer
    %s28 = sadd.s32 1, %s24
  $region7: #{ginet_forward.1} parent=0 // loop_footer_branch
    %23 = sbr.rel target = $region3
  $region8: #{ginet_forward.1} parent=0 // loop_exit
    _

</llo_original>
